<compile_context>
chip_gen: v5e
topology: v5e:2x2
jax: 0.10.0
libtpu: 0.0.40
codegen_flags: <defaults>
</compile_context>

<pallas_src>
import jax
import jax.numpy as jnp
import numpy as np
from jax.experimental import pallas as pl
from jax.experimental.pallas import tpu as pltpu

_BIG = 1e12      # additive mask penalty (Python float -> nothing captured)
_THRESH = 1e10   # separates genuine squared distances (<< 1e10) from penalties


def _hd_kernel(a_ref, b_ref, out_ref, acc_ref, rowmin_ref, colmin_ref):
    """Grid = (n_class, num_p_tiles, num_q_tiles); q tiles innermost.

    a_ref     : (TP, 8)   f32  augmented "p" rows for this (class, p-tile)
    b_ref     : (8, TQ)   f32  augmented "q" cols for this (class, q-tile)
    out_ref   : (1, 1)    f32  per-class Hausdorff distance
    acc_ref   : (1, 1)    f32  running max over both directed distances^2
    rowmin_ref: (TP, 1)   f32  per-p-row min over q, accumulated over q-tiles
    colmin_ref: (NQT, TQ) f32  per-q-col min over p (row qt), accum. over p-tiles
    """
    pt = pl.program_id(1)
    qt = pl.program_id(2)
    npt = pl.num_programs(1)
    nqt = pl.num_programs(2)

    @pl.when((pt == 0) & (qt == 0))
    def _():
        acc_ref[...] = jnp.full_like(acc_ref[...], -1.0)

    # |p-q|^2 + BIG*(1-pred_row) + BIG*(1-ref_col), all in one MXU matmul.
    d2 = jnp.dot(a_ref[...], b_ref[...],
                 preferred_element_type=jnp.float32)          # (TP, TQ)

    # --- direction 1 state: per pred-row min over ref columns (across q tiles)
    tile_rowmin = jnp.min(d2, axis=1, keepdims=True)          # (TP, 1)

    @pl.when(qt == 0)
    def _():
        rowmin_ref[...] = tile_rowmin

    @pl.when(qt > 0)
    def _():
        rowmin_ref[...] = jnp.minimum(rowmin_ref[...], tile_rowmin)

    # --- direction 2 state: per ref-col min over pred rows (across p tiles)
    tile_colmin = jnp.min(d2, axis=0, keepdims=True)          # (1, TQ)

    @pl.when(pt == 0)
    def _():
        colmin_ref[pl.ds(qt, 1), :] = tile_colmin

    @pl.when(pt > 0)
    def _():
        colmin_ref[pl.ds(qt, 1), :] = jnp.minimum(
            colmin_ref[pl.ds(qt, 1), :], tile_colmin)

    # --- finalize direction 1 for this p-tile (all q tiles seen).
    # Non-pred rows carry a +BIG penalty in every entry, so thresholding the
    # accumulated row min recovers the pred mask for free.
    @pl.when(qt == nqt - 1)
    def _():
        rm = rowmin_ref[...]
        masked = jnp.where(rm < _THRESH, rm, -1.0)
        acc_ref[...] = jnp.maximum(acc_ref[...], jnp.max(masked))

    # --- finalize direction 2 for this q-tile (all p tiles seen).
    # Non-ref columns carry a +BIG penalty in every entry -> threshold.
    @pl.when(pt == npt - 1)
    def _():
        cm = colmin_ref[pl.ds(qt, 1), :]
        masked = jnp.where(cm < _THRESH, cm, -1.0)
        acc_ref[...] = jnp.maximum(acc_ref[...], jnp.max(masked))

    @pl.when((pt == npt - 1) & (qt == nqt - 1))
    def _():
        # clamp only the final scalar (handles tiny negative f32 round-off).
        out_ref[...] = jnp.sqrt(jnp.maximum(acc_ref[...], 0.0))


def hausdorff_distance_metric_3d(y_pred, y, *, include_background=True,
                                 percentile=95.0, tile_p=512, tile_q=2048):
    """JAX/Pallas equivalent of HausdorffDistanceMetric3d.forward."""
    # validate the percentile BEFORE paying for the kernel (mirrors the
    # reference returning None when the percentile check fails).
    if percentile is None or not (0.0 <= float(percentile) <= 100.0):
        return None

    if not include_background:
        y_pred = y_pred[:, 1:]
        y = y[:, 1:]
    if y_pred.shape != y.shape:
        raise ValueError(f"y_pred and y should have same shapes, got "
                         f"{y_pred.shape} and {y.shape}.")
    assert tile_p % 8 == 0 and tile_q % 128 == 0

    B, C, D, H, W = y_pred.shape
    N = B * D * H * W

    # pad voxel count to a multiple of both tiles; padded voxels get penalty
    # BIG on both sides so they never contribute.
    step = int(np.lcm(tile_p, tile_q))
    Np = ((N + step - 1) // step) * step
    pad = Np - N

    # voxel coordinates in (b, d, h, w) space (the channel coordinate of the
    # reference's 5-D distance transform is constant and contributes nothing).
    bb, dd, hh, ww = jnp.meshgrid(jnp.arange(B), jnp.arange(D),
                                  jnp.arange(H), jnp.arange(W), indexing="ij")
    coords = jnp.stack([bb, dd, hh, ww], axis=-1).reshape(N, 4).astype(jnp.float32)
    sqnorm = jnp.sum(coords * coords, axis=1)                         # (N,)

    pred_m = (jnp.transpose(y_pred, (1, 0, 2, 3, 4)).reshape(C, N) != 0)
    ref_m = (jnp.transpose(y, (1, 0, 2, 3, 4)).reshape(C, N) != 0)
    pred_m = pred_m.astype(jnp.float32)
    ref_m = ref_m.astype(jnp.float32)

    if pad:
        coords = jnp.pad(coords, ((0, pad), (0, 0)))
        sqnorm = jnp.pad(sqnorm, (0, pad))
        pred_m = jnp.pad(pred_m, ((0, 0), (0, pad)))
        ref_m = jnp.pad(ref_m, ((0, 0), (0, pad)))

    # A (C, Np, 8): [p(4), ||p||^2, 1, BIG*(1-pred_mask), 0]
    base = jnp.concatenate(
        [coords, sqnorm[:, None], jnp.ones((Np, 1), jnp.float32)], axis=1)   # (Np, 6)
    pen_a = (_BIG * (1.0 - pred_m))[:, :, None]                              # (C, Np, 1)
    a_mat = jnp.concatenate(
        [jnp.broadcast_to(base[None], (C, Np, 6)), pen_a,
         jnp.zeros((C, Np, 1), jnp.float32)], axis=2)                        # (C, Np, 8)

    # B (C, 8, Np): [-2 q(4) ; 1 ; ||q||^2 + BIG*(1-ref_mask) ; 1 ; 0]
    qrow = sqnorm[None, :] + _BIG * (1.0 - ref_m)                            # (C, Np)
    b_mat = jnp.concatenate(
        [jnp.broadcast_to((-2.0 * coords.T)[None], (C, 4, Np)),
         jnp.ones((C, 1, Np), jnp.float32),
         qrow[:, None, :],
         jnp.ones((C, 1, Np), jnp.float32),
         jnp.zeros((C, 1, Np), jnp.float32)], axis=1)                        # (C, 8, Np)

    npt = Np // tile_p
    nqt = Np // tile_q

    hd_per_class = pl.pallas_call(
        _hd_kernel,
        out_shape=jax.ShapeDtypeStruct((C, 1, 1), jnp.float32),
        grid_spec=pltpu.PrefetchScalarGridSpec(
            num_scalar_prefetch=0,
            grid=(C, npt, nqt),
            in_specs=[
                # A tile: resident across the inner q loop (index ignores qt).
                pl.BlockSpec((None, tile_p, 8), lambda c, i, j: (c, i, 0)),
                # B tile: streamed per q tile, lane-dense.
                pl.BlockSpec((None, 8, tile_q), lambda c, i, j: (c, 0, j)),
            ],
            out_specs=pl.BlockSpec((None, 1, 1), lambda c, i, j: (c, 0, 0)),
            scratch_shapes=[
                pltpu.VMEM((1, 1), jnp.float32),          # running max (both dirs)
                pltpu.VMEM((tile_p, 1), jnp.float32),     # per-row min over q
                pltpu.VMEM((nqt, tile_q), jnp.float32),   # per-col min over p
            ],
        ),
        compiler_params=pltpu.CompilerParams(
            dimension_semantics=("parallel", "arbitrary", "arbitrary"),
            vmem_limit_bytes=48 * 1024 * 1024),
    )(a_mat, b_mat)

    hd_vals = hd_per_class.reshape(C)
    # np.percentile over the per-class Hausdorff distances (glue, plain JAX).
    return jnp.percentile(hd_vals, percentile)


def _reference_np(y_pred, y, include_background, percentile):
    """Pure-numpy reference (brute-force symmetric Hausdorff + percentile)."""
    y_pred = np.asarray(y_pred)
    y = np.asarray(y)
    if not include_background:
        y_pred, y = y_pred[:, 1:], y[:, 1:]
    B, C, D, H, W = y_pred.shape
    bb, dd, hh, ww = np.meshgrid(np.arange(B), np.arange(D), np.arange(H),
                                 np.arange(W), indexing="ij")
    coords = np.stack([bb, dd, hh, ww], -1).reshape(-1, 4).astype(np.float64)
    dist = np.sqrt(((coords[:, None, :] - coords[None, :, :]) ** 2).sum(-1))
    hds = []
    for c in range(C):
        a = y_pred[:, c].reshape(-1) != 0
        b = y[:, c].reshape(-1) != 0
        d_ab = dist[np.ix_(a, b)]
        hd1 = d_ab.min(axis=1).max()
        hd2 = d_ab.min(axis=0).max()
        hds.append(max(hd1, hd2))
    return np.percentile(hds, percentile)


if __name__ == "__main__":
    # small shapes consistent with a 3-D segmentation metric: (B, C, D, H, W)
    B, C, D, H, W = 2, 4, 8, 8, 8
    key = jax.random.PRNGKey(0)
    k1, k2 = jax.random.split(key)
    y_pred = (jax.random.uniform(k1, (B, C, D, H, W)) > 0.5).astype(jnp.float32)
    y = (jax.random.uniform(k2, (B, C, D, H, W)) > 0.5).astype(jnp.float32)
    # guarantee non-empty foreground per class (the reference metric requires it)
    y_pred = y_pred.at[:, :, 0, 0, 0].set(1.0)
    y = y.at[:, :, 0, 0, 0].set(1.0)

    pct = 95.0
    # small tiles here so the demo exercises both the p-tile and q-tile loops.
    out = hausdorff_distance_metric_3d(y_pred, y, include_background=True,
                                       percentile=pct, tile_p=256, tile_q=512)
    out = jax.block_until_ready(out)

    ref = _reference_np(y_pred, y, include_background=True, percentile=pct)
    np.testing.assert_allclose(np.asarray(out, dtype=np.float64), ref,
                               rtol=1e-4, atol=1e-4)
    print("KERNEL_OK")
</pallas_src>

<mosaic_0001>
module attributes {stable_mosaic.version = 11 : i64} {
  func.func @_hd_kernel(%arg0: i32, %arg1: i32, %arg2: i32, %arg3: memref<1x256x8xf32, #tpu.memory_space<vmem>>, %arg4: memref<1x8x512xf32, #tpu.memory_space<vmem>>, %arg5: memref<1x1x1xf32, #tpu.memory_space<vmem>>, %arg6: memref<1x1xf32, #tpu.memory_space<vmem>>, %arg7: memref<256x1xf32, #tpu.memory_space<vmem>>, %arg8: memref<2x512xf32, #tpu.memory_space<vmem>>) attributes {dimension_semantics = [#tpu.dimension_semantics<parallel>, #tpu.dimension_semantics<arbitrary>, #tpu.dimension_semantics<arbitrary>], iteration_bounds = array<i64: 4, 4, 2>, scalar_prefetch = 0 : i64, scratch_operands = 3 : i64, tpu.core_type = #tpu.core_type<tc>, window_params = [{transform_indices = @transform_0, window_bounds = array<i64: 1, 256, 8>}, {transform_indices = @transform_1, window_bounds = array<i64: 1, 8, 512>}, {transform_indices = @transform_2, window_bounds = array<i64: 1, 1, 1>}]} {
    %c0_i32 = arith.constant 0 : i32
    %0 = arith.cmpi eq, %arg1, %c0_i32 : i32
    %c0_i32_0 = arith.constant 0 : i32
    %1 = arith.cmpi eq, %arg2, %c0_i32_0 : i32
    %2 = arith.andi %0, %1 : i1
    %3 = arith.extui %2 : i1 to i32
    %c0_i32_1 = arith.constant 0 : i32
    %4 = arith.cmpi ne, %3, %c0_i32_1 : i32
    scf.if %4 {
      %cst_22 = arith.constant -1.000000e+00 : f32
      %37 = vector.broadcast %cst_22 : f32 to vector<1x1xf32>
      %c0_23 = arith.constant 0 : index
      %c0_24 = arith.constant 0 : index
      %38 = vector.load %arg6[%c0_23, %c0_24] : memref<1x1xf32, #tpu.memory_space<vmem>>, vector<1x1xf32>
      tpu.vector_store %arg6[%c0_23, %c0_24], %37 {strides = array<i32>} : memref<1x1xf32, #tpu.memory_space<vmem>>, vector<1x1xf32>,
    } else {
    }
    %c0 = arith.constant 0 : index
    %c0_2 = arith.constant 0 : index
    %c0_3 = arith.constant 0 : index
    %5 = vector.load %arg3[%c0, %c0_2, %c0_3] : memref<1x256x8xf32, #tpu.memory_space<vmem>>, vector<1x256x8xf32>
    %6 = vector.shape_cast %5 : vector<1x256x8xf32> to vector<256x8xf32>
    %c0_4 = arith.constant 0 : index
    %c0_5 = arith.constant 0 : index
    %c0_6 = arith.constant 0 : index
    %7 = vector.load %arg4[%c0_4, %c0_5, %c0_6] : memref<1x8x512xf32, #tpu.memory_space<vmem>>, vector<1x8x512xf32>
    %8 = vector.shape_cast %7 : vector<1x8x512xf32> to vector<8x512xf32>
    %cst = arith.constant dense<0.000000e+00> : vector<256x512xf32>
    %9 = tpu.matmul %6, %8, %cst {dimension_numbers = #tpu.dot_dimension_numbers<[1], [0], [0], [1], [0, 0, 1, 1], [], []>} : vector<256x8xf32>, vector<8x512xf32>, vector<256x512xf32> -> vector<256x512xf32>
    %cst_7 = arith.constant dense<0x7F800000> : vector<256xf32>
    %10 = vector.multi_reduction <minimumf>, %9, %cst_7 [1] : vector<256x512xf32> to vector<256xf32>
    %11 = vector.shape_cast %10 : vector<256xf32> to vector<256x1xf32>
    %c0_i32_8 = arith.constant 0 : i32
    %12 = arith.cmpi eq, %arg2, %c0_i32_8 : i32
    %13 = arith.extui %12 : i1 to i32
    %c0_i32_9 = arith.constant 0 : i32
    %14 = arith.cmpi ne, %13, %c0_i32_9 : i32
    scf.if %14 {
      %c0_22 = arith.constant 0 : index
      %c0_23 = arith.constant 0 : index
      %37 = vector.load %arg7[%c0_22, %c0_23] : memref<256x1xf32, #tpu.memory_space<vmem>>, vector<256x1xf32>
      tpu.vector_store %arg7[%c0_22, %c0_23], %11 {strides = array<i32>} : memref<256x1xf32, #tpu.memory_space<vmem>>, vector<256x1xf32>,
    } else {
    }
    %c0_i32_10 = arith.constant 0 : i32
    %15 = arith.cmpi sgt, %arg2, %c0_i32_10 : i32
    %16 = arith.extui %15 : i1 to i32
    %c0_i32_11 = arith.constant 0 : i32
    %17 = arith.cmpi ne, %16, %c0_i32_11 : i32
    scf.if %17 {
      %c0_22 = arith.constant 0 : index
      %c0_23 = arith.constant 0 : index
      %37 = vector.load %arg7[%c0_22, %c0_23] : memref<256x1xf32, #tpu.memory_space<vmem>>, vector<256x1xf32>
      %38 = arith.minimumf %37, %11 : vector<256x1xf32>
      %c0_24 = arith.constant 0 : index
      %c0_25 = arith.constant 0 : index
      %39 = vector.load %arg7[%c0_24, %c0_25] : memref<256x1xf32, #tpu.memory_space<vmem>>, vector<256x1xf32>
      tpu.vector_store %arg7[%c0_24, %c0_25], %38 {strides = array<i32>} : memref<256x1xf32, #tpu.memory_space<vmem>>, vector<256x1xf32>,
    } else {
    }
    %cst_12 = arith.constant dense<0x7F800000> : vector<512xf32>
    %18 = vector.multi_reduction <minimumf>, %9, %cst_12 [0] : vector<256x512xf32> to vector<512xf32>
    %19 = vector.shape_cast %18 : vector<512xf32> to vector<1x512xf32>
    %c0_i32_13 = arith.constant 0 : i32
    %20 = arith.cmpi eq, %arg1, %c0_i32_13 : i32
    %21 = arith.extui %20 : i1 to i32
    %c0_i32_14 = arith.constant 0 : i32
    %22 = arith.cmpi ne, %21, %c0_i32_14 : i32
    scf.if %22 {
      %37 = arith.index_cast %arg2 : i32 to index
      %c0_22 = arith.constant 0 : index
      %38 = vector.load %arg8[%37, %c0_22] : memref<2x512xf32, #tpu.memory_space<vmem>>, vector<1x512xf32>
      tpu.vector_store %arg8[%37, %c0_22], %19 {strides = array<i32>} : memref<2x512xf32, #tpu.memory_space<vmem>>, vector<1x512xf32>,
    } else {
    }
    %c0_i32_15 = arith.constant 0 : i32
    %23 = arith.cmpi sgt, %arg1, %c0_i32_15 : i32
    %24 = arith.extui %23 : i1 to i32
    %c0_i32_16 = arith.constant 0 : i32
    %25 = arith.cmpi ne, %24, %c0_i32_16 : i32
    scf.if %25 {
      %37 = arith.index_cast %arg2 : i32 to index
      %c0_22 = arith.constant 0 : index
      %38 = vector.load %arg8[%37, %c0_22] : memref<2x512xf32, #tpu.memory_space<vmem>>, vector<1x512xf32>
      %39 = arith.minimumf %38, %19 : vector<1x512xf32>
      %40 = arith.index_cast %arg2 : i32 to index
      %c0_23 = arith.constant 0 : index
      %41 = vector.load %arg8[%40, %c0_23] : memref<2x512xf32, #tpu.memory_space<vmem>>, vector<1x512xf32>
      tpu.vector_store %arg8[%40, %c0_23], %39 {strides = array<i32>} : memref<2x512xf32, #tpu.memory_space<vmem>>, vector<1x512xf32>,
    } else {
    }
    %c1_i32 = arith.constant 1 : i32
    %26 = arith.cmpi eq, %arg2, %c1_i32 : i32
    %27 = arith.extui %26 : i1 to i32
    %c0_i32_17 = arith.constant 0 : i32
    %28 = arith.cmpi ne, %27, %c0_i32_17 : i32
    scf.if %28 {
      %c0_22 = arith.constant 0 : index
      %c0_23 = arith.constant 0 : index
      %37 = vector.load %arg7[%c0_22, %c0_23] : memref<256x1xf32, #tpu.memory_space<vmem>>, vector<256x1xf32>
      %cst_24 = arith.constant 1.000000e+10 : f32
      %38 = vector.broadcast %cst_24 : f32 to vector<256x1xf32>
      %39 = arith.cmpf olt, %37, %38 : vector<256x1xf32>
      %cst_25 = arith.constant -1.000000e+00 : f32
      %40 = vector.broadcast %cst_25 : f32 to vector<256x1xf32>
      %41 = arith.select %39, %37, %40 : vector<256x1xi1>, vector<256x1xf32>
      %c0_26 = arith.constant 0 : index
      %c0_27 = arith.constant 0 : index
      %42 = vector.load %arg6[%c0_26, %c0_27] : memref<1x1xf32, #tpu.memory_space<vmem>>, vector<1x1xf32>
      %43 = vector.shape_cast %41 : vector<256x1xf32> to vector<1x256x1xf32>
      %cst_28 = arith.constant dense<0xFF800000> : vector<1xf32>
      %44 = vector.multi_reduction <maximumf>, %43, %cst_28 [1, 2] : vector<1x256x1xf32> to vector<1xf32>
      %45 = vector.shape_cast %44 : vector<1xf32> to vector<1x1x1xf32>
      %46 = vector.extract %45[0, 0, 0] : f32 from vector<1x1x1xf32>
      %47 = vector.broadcast %46 : f32 to vector<1x1xf32>
      %48 = arith.maximumf %42, %47 : vector<1x1xf32>
      %c0_29 = arith.constant 0 : index
      %c0_30 = arith.constant 0 : index
      %49 = vector.load %arg6[%c0_29, %c0_30] : memref<1x1xf32, #tpu.memory_space<vmem>>, vector<1x1xf32>
      tpu.vector_store %arg6[%c0_29, %c0_30], %48 {strides = array<i32>} : memref<1x1xf32, #tpu.memory_space<vmem>>, vector<1x1xf32>,
    } else {
    }
    %c3_i32 = arith.constant 3 : i32
    %29 = arith.cmpi eq, %arg1, %c3_i32 : i32
    %30 = arith.extui %29 : i1 to i32
    %c0_i32_18 = arith.constant 0 : i32
    %31 = arith.cmpi ne, %30, %c0_i32_18 : i32
    scf.if %31 {
      %37 = arith.index_cast %arg2 : i32 to index
      %c0_22 = arith.constant 0 : index
      %38 = vector.load %arg8[%37, %c0_22] : memref<2x512xf32, #tpu.memory_space<vmem>>, vector<1x512xf32>
      %cst_23 = arith.constant 1.000000e+10 : f32
      %39 = vector.broadcast %cst_23 : f32 to vector<1x512xf32>
      %40 = arith.cmpf olt, %38, %39 : vector<1x512xf32>
      %cst_24 = arith.constant -1.000000e+00 : f32
      %41 = vector.broadcast %cst_24 : f32 to vector<1x512xf32>
      %42 = arith.select %40, %38, %41 : vector<1x512xi1>, vector<1x512xf32>
      %c0_25 = arith.constant 0 : index
      %c0_26 = arith.constant 0 : index
      %43 = vector.load %arg6[%c0_25, %c0_26] : memref<1x1xf32, #tpu.memory_space<vmem>>, vector<1x1xf32>
      %44 = vector.shape_cast %42 : vector<1x512xf32> to vector<1x1x512xf32>
      %cst_27 = arith.constant dense<0xFF800000> : vector<1xf32>
      %45 = vector.multi_reduction <maximumf>, %44, %cst_27 [1, 2] : vector<1x1x512xf32> to vector<1xf32>
      %46 = vector.shape_cast %45 : vector<1xf32> to vector<1x1x1xf32>
      %47 = vector.extract %46[0, 0, 0] : f32 from vector<1x1x1xf32>
      %48 = vector.broadcast %47 : f32 to vector<1x1xf32>
      %49 = arith.maximumf %43, %48 : vector<1x1xf32>
      %c0_28 = arith.constant 0 : index
      %c0_29 = arith.constant 0 : index
      %50 = vector.load %arg6[%c0_28, %c0_29] : memref<1x1xf32, #tpu.memory_space<vmem>>, vector<1x1xf32>
      tpu.vector_store %arg6[%c0_28, %c0_29], %49 {strides = array<i32>} : memref<1x1xf32, #tpu.memory_space<vmem>>, vector<1x1xf32>,
    } else {
    }
    %c3_i32_19 = arith.constant 3 : i32
    %32 = arith.cmpi eq, %arg1, %c3_i32_19 : i32
    %c1_i32_20 = arith.constant 1 : i32
    %33 = arith.cmpi eq, %arg2, %c1_i32_20 : i32
    %34 = arith.andi %32, %33 : i1
    %35 = arith.extui %34 : i1 to i32
    %c0_i32_21 = arith.constant 0 : i32
    %36 = arith.cmpi ne, %35, %c0_i32_21 : i32
    scf.if %36 {
      %c0_22 = arith.constant 0 : index
      %c0_23 = arith.constant 0 : index
      %37 = vector.load %arg6[%c0_22, %c0_23] : memref<1x1xf32, #tpu.memory_space<vmem>>, vector<1x1xf32>
      %cst_24 = arith.constant 0.000000e+00 : f32
      %38 = vector.broadcast %cst_24 : f32 to vector<1x1xf32>
      %39 = arith.maximumf %37, %38 : vector<1x1xf32>
      %40 = math.sqrt %39 : vector<1x1xf32>
      %c0_25 = arith.constant 0 : index
      %c0_26 = arith.constant 0 : index
      %c0_27 = arith.constant 0 : index
      %41 = vector.load %arg5[%c0_25, %c0_26, %c0_27] : memref<1x1x1xf32, #tpu.memory_space<vmem>>, vector<1x1x1xf32>
      %42 = vector.shape_cast %41 : vector<1x1x1xf32> to vector<1x1xf32>
      %43 = vector.shape_cast %40 : vector<1x1xf32> to vector<1x1x1xf32>
      tpu.vector_store %arg5[%c0_25, %c0_26, %c0_27], %43 {strides = array<i32>} : memref<1x1x1xf32, #tpu.memory_space<vmem>>, vector<1x1x1xf32>,
    } else {
    }
    return
  }
  func.func @transform_0(%arg0: i32, %arg1: i32, %arg2: i32) -> (i32, i32, i32) {
    %c0_i32 = arith.constant 0 : i32
    %c0_i32_0 = arith.constant 0 : i32
    return %arg0, %arg1, %c0_i32 : i32, i32, i32
  }
  func.func @transform_1(%arg0: i32, %arg1: i32, %arg2: i32) -> (i32, i32, i32) {
    %c0_i32 = arith.constant 0 : i32
    %c0_i32_0 = arith.constant 0 : i32
    return %arg0, %c0_i32, %arg2 : i32, i32, i32
  }
  func.func @transform_2(%arg0: i32, %arg1: i32, %arg2: i32) -> (i32, i32, i32) {
    %c0_i32 = arith.constant 0 : i32
    %c0_i32_0 = arith.constant 0 : i32
    %c0_i32_1 = arith.constant 0 : i32
    return %arg0, %c0_i32, %c0_i32_0 : i32, i32, i32
  }
}

</mosaic_0001>

<llo_original>
// kernel: tpu_custom_call.1
$region0: #{tpu_custom_call.1}
  #allocation0 [shape = 'u32[]', space=smem, size = 0x4, offset = 0x4, fixed_abs, tag = 'smem constant byte address 0x4 - core index']
  #allocation1 [shape = 'u32[72,128]{1,0:T(1,128)}', space=vmem, size = 0x9000, scoped, tag = 'internal scratch']
  #allocation2 [shape = 'f32[1,1]{1,0:T(1,128)}', space=vmem, size = 0x200, scoped, tag = 'scratch operand']
  #allocation3 [shape = 'f32[256,1]{1,0:T(8,128)}', space=vmem, size = 0x20000, scoped, tag = 'scratch operand']
  #allocation4 [shape = 'f32[2,512]{1,0:T(2,128)}', space=vmem, size = 0x1000, scoped, tag = 'scratch operand']
  %s0 = inlined_call_operand.vmem [shape: f32[4,1024,8], index: 0, kind: input, shape index: {}]
  %s1 = inlined_call_operand.vmem [shape: f32[4,8,1024], index: 1, kind: input, shape index: {}]
  %s2 = inlined_call_operand.vmem [shape: f32[4,1,1], index: 2, kind: output, shape index: {}]
  %s3 = sld [smem:[#allocation0]]
  $region73: #{tpu_custom_call.1} parent=0
    _
  %s5 = ssub.s32 1, %s3
  %s6 = scalar_select 0, %s5, %s3
  loop: start=0, step=1, limit=34
  $region2: #{tpu_custom_call.1} parent=0 // loop_pre_header
    _
  $region3: #{tpu_custom_call.1} parent=0 // loop_header
    %s8 = sphi 0, %s12
    %p9 = scmp.ge.s32.totalorder %s8, 34
    %s15 = sphi 0, %s34
    %s16 = sphi 0, %s30
    %s17 = sphi 0, %s26
    %s18 = sphi 0, %s15
    %s19 = sphi 0, %s16
    %s20 = sphi 0, %s17
    %s21 = sphi 0, %s18
    %s22 = sphi 0, %s19
    %s23 = sphi 0, %s20
    %s39 = sphi 0, %s41
    %s42 = sphi 0, %s39
    %s43 = sphi 0, %s42
    %s59 = sphi 0, %s43
    %s67 = sphi 0, %s69
    %s70 = sphi 0, %s67
    %s71 = sphi 0, %s70
    %s87 = sphi 0, %s71
    %s93 = sphi 0, %s95
    %s96 = sphi 0, %s93
    %s97 = sphi 0, %s96
    %s113 = sphi 0, %s97
  $region4: #{tpu_custom_call.1} parent=0 // loop_header_branch
    %11 = sbr.rel (%p9) target = $region8
  $region5: #{tpu_custom_call.1} parent=0 // loop_body
    %s13 = ssub.s32 %s8, 1
    %s14 = ssub.s32 %s8, 2
    %s24 = sadd.s32 1, %s17
    %p25 = scmp.ge.s32.totalorder %s24, 2
    %s26 = scalar_select %p25, 0, %s24
    %s27 = sadd.s32 1, %s16
    %s28 = scalar_select %p25, %s27, %s16
    %p29 = scmp.ge.s32.totalorder %s28, 4
    %s30 = scalar_select %p29, 0, %s28
    %s31 = sadd.s32 1, %s15
    %s32 = scalar_select %p29, %s31, %s15
    %p33 = scmp.ge.s32.totalorder %s32, 4
    %s34 = scalar_select %p33, 0, %s32
    %s35 = ssub.s32 %s15, %s34
    %s36 = ssub.s32 %s16, %s30
    %s37 = sor.u32 %s35, %s36
    %p38 = scmp.eq.s32.totalorder %s37, 0
    %s40 = sadd.s32 %s39, 1
    %s41 = scalar_select %p38, %s39, %s40
    %p44 = pneg %p38
    %p45 = scmp.eq.s32.totalorder %s8, 31
    %p46 = por %p44, %p45
    %p47 = scmp.ne.s32.totalorder %s39, %s42
    %p48 = scmp.eq.s32.totalorder %s8, 0
    %p49 = por %p47, %p48
    %p50 = scmp.ne.s32.totalorder %s39, %s42
    %p51 = scmp.eq.s32.totalorder %s13, 31
    %p52 = por %p50, %p51
    %p53 = scmp.ne.s32.totalorder %s42, %s43
    %p54 = scmp.eq.s32.totalorder %s13, 0
    %p55 = por %p53, %p54
    %p56 = scmp.ne.s32.totalorder %s42, %s43
    %p57 = scmp.eq.s32.totalorder %s14, 31
    %p58 = por %p56, %p57
    %p60 = scmp.ne.s32.totalorder %s43, %s59
    %p61 = scmp.eq.s32.totalorder %s14, 0
    %p62 = por %p60, %p61
    %s63 = ssub.s32 %s15, %s34
    %s64 = ssub.s32 %s17, %s26
    %s65 = sor.u32 %s63, %s64
    %p66 = scmp.eq.s32.totalorder %s65, 0
    %s68 = sadd.s32 %s67, 1
    %s69 = scalar_select %p66, %s67, %s68
    %p72 = pneg %p66
    %p73 = scmp.eq.s32.totalorder %s8, 31
    %p74 = por %p72, %p73
    %p75 = scmp.ne.s32.totalorder %s67, %s70
    %p76 = scmp.eq.s32.totalorder %s8, 0
    %p77 = por %p75, %p76
    %p78 = scmp.ne.s32.totalorder %s67, %s70
    %p79 = scmp.eq.s32.totalorder %s13, 31
    %p80 = por %p78, %p79
    %p81 = scmp.ne.s32.totalorder %s70, %s71
    %p82 = scmp.eq.s32.totalorder %s13, 0
    %p83 = por %p81, %p82
    %p84 = scmp.ne.s32.totalorder %s70, %s71
    %p85 = scmp.eq.s32.totalorder %s14, 31
    %p86 = por %p84, %p85
    %p88 = scmp.ne.s32.totalorder %s71, %s87
    %p89 = scmp.eq.s32.totalorder %s14, 0
    %p90 = por %p88, %p89
    %s91 = ssub.s32 %s15, %s34
    %p92 = scmp.eq.s32.totalorder %s91, 0
    %s94 = sadd.s32 %s93, 1
    %s95 = scalar_select %p92, %s93, %s94
    %p98 = pneg %p92
    %p99 = scmp.eq.s32.totalorder %s8, 31
    %p100 = por %p98, %p99
    %p101 = scmp.ne.s32.totalorder %s93, %s96
    %p102 = scmp.eq.s32.totalorder %s8, 0
    %p103 = por %p101, %p102
    %p104 = scmp.ne.s32.totalorder %s93, %s96
    %p105 = scmp.eq.s32.totalorder %s13, 31
    %p106 = por %p104, %p105
    %p107 = scmp.ne.s32.totalorder %s96, %s97
    %p108 = scmp.eq.s32.totalorder %s13, 0
    %p109 = por %p107, %p108
    %p110 = scmp.ne.s32.totalorder %s96, %s97
    %p111 = scmp.eq.s32.totalorder %s14, 31
    %p112 = por %p110, %p111
    %p114 = scmp.ne.s32.totalorder %s97, %s113
    %p115 = scmp.eq.s32.totalorder %s14, 0
    %p116 = por %p114, %p115
    %p117 = scmp.le.s32.totalorder 1, %s8
    %p118 = scmp.lt.s32.totalorder %s8, 33
    %p119 = pnand %p117, %p118
    %p120 = pneg %p119
    // Predicated region
    $region9: #{tpu_custom_call.1} parent=5 // pred_check
      _
    $region10: #{tpu_custom_call.1} parent=5 // pred_check_branch
      %122 = sbr.rel (%p119) target = $region12
    $region11: #{tpu_custom_call.1} parent=5 // pred_region
      %s123 = ssub.s32 %s8, 1
    $region12: #{tpu_custom_call.1} parent=5 // pred_fallthru
      _
    %p124 = scmp.lt.s32.totalorder %s8, 32
    // Predicated region
    $region13: #{tpu_custom_call.1} parent=5 // pred_check
      %p125 = pneg %p124
    $region14: #{tpu_custom_call.1} parent=5 // pred_check_branch
      %127 = sbr.rel (%p125) target = $region16
    $region15: #{tpu_custom_call.1} parent=5 // pred_region
      // Predicated region
      $region17: #{tpu_custom_call.1} parent=15 // pred_check
        %p128 = pneg %p49
      $region18: #{tpu_custom_call.1} parent=15 // pred_check_branch
        %130 = sbr.rel (%p128) target = $region20
      $region19: #{tpu_custom_call.1} parent=15 // pred_region
        %s131 = smul.u32 32, %s16
        %p132 = scmp.lt.s32.totalorder %s15, 3
        %s133 = scalar_select %p132, %s15, 3
        %p134 = scmp.lt.s32.totalorder %s131, 127
        %s135 = scalar_select %p134, %s131, 127
        %s136 = smul.addr %s133, 128
        %s137 = sadd.s32 %s135, %s136
        %s138 = smul.addr %s137, 8
        %s139 = scalar_lea.vmem %s0, %s138
        %s140 = smul.u32 32, %s16
      $region20: #{tpu_custom_call.1} parent=15 // pred_fallthru
        _
      // Predicated region
      $region21: #{tpu_custom_call.1} parent=15 // pred_check
        %p141 = pneg %p77
      $region22: #{tpu_custom_call.1} parent=15 // pred_check_branch
        %143 = sbr.rel (%p141) target = $region24
      $region23: #{tpu_custom_call.1} parent=15 // pred_region
        %s144 = smul.u32 4, %s17
        %p145 = scmp.lt.s32.totalorder %s15, 3
        %s146 = scalar_select %p145, %s15, 3
        %p147 = scmp.lt.s32.totalorder %s144, 7
        %s148 = scalar_select %p147, %s144, 7
        %s149 = smul.addr %s146, 8
        %s150 = sadd.s32 %s148, %s149
        %s151 = smul.addr %s150, 8
        %s152 = scalar_lea.vmem %s1, %s151
        %s153 = smul.u32 4, %s17
      $region24: #{tpu_custom_call.1} parent=15 // pred_fallthru
        _
    $region16: #{tpu_custom_call.1} parent=5 // pred_fallthru
      _
    %p154 = scmp.le.s32.totalorder 1, %s8
    %p155 = scmp.lt.s32.totalorder %s8, 33
    %p156 = pnand %p154, %p155
    %p157 = pneg %p156
    // Predicated region
    $region25: #{tpu_custom_call.1} parent=5 // pred_check
      _
    $region26: #{tpu_custom_call.1} parent=5 // pred_check_branch
      %159 = sbr.rel (%p156) target = $region28
    $region27: #{tpu_custom_call.1} parent=5 // pred_region
      %s160 = ssub.s32 %s8, 1
      %s161 = smul.u32 32, %s19
      %p162 = scmp.lt.s32.totalorder %s18, 3
      %s163 = scalar_select %p162, %s18, 3
      %p164 = scmp.lt.s32.totalorder %s161, 127
      %s165 = scalar_select %p164, %s161, 127
      %s166 = smul.addr %s163, 128
      %s167 = sadd.s32 %s165, %s166
      %s168 = smul.addr %s167, 8
      %s169 = scalar_lea.vmem %s0, %s168
      %p170 = pneg %p55
      %p171 = pneg %p52
      %s172 = smul.u32 4, %s20
      %p173 = scmp.lt.s32.totalorder %s18, 3
      %s174 = scalar_select %p173, %s18, 3
      %p175 = scmp.lt.s32.totalorder %s172, 7
      %s176 = scalar_select %p175, %s172, 7
      %s177 = smul.addr %s174, 8
      %s178 = sadd.s32 %s176, %s177
      %s179 = smul.addr %s178, 8
      %s180 = scalar_lea.vmem %s1, %s179
      %p181 = pneg %p83
      %p182 = pneg %p80
      %p183 = pneg %p109
      %p184 = pneg %p106
      %p185 = scmp.lt.s32.totalorder %s18, 3
      %s186 = scalar_select %p185, %s18, 3
      %s187 = scalar_lea.vmem %s2, %s186
      %s188 = smul.u32 32, %s19
      %p189 = scmp.lt.s32.totalorder %s18, 3
      %s190 = scalar_select %p189, %s18, 3
      %p191 = scmp.lt.s32.totalorder %s188, 127
      %s192 = scalar_select %p191, %s188, 127
      %s193 = smul.addr %s190, 128
      %s194 = sadd.s32 %s192, %s193
      %s195 = smul.addr %s194, 8
      %s196 = scalar_lea.vmem %s0, %s195
      %s197 = smul.u32 32, %s19
      %s198 = smul.u32 4, %s20
      %p199 = scmp.lt.s32.totalorder %s18, 3
      %s200 = scalar_select %p199, %s18, 3
      %p201 = scmp.lt.s32.totalorder %s198, 7
      %s202 = scalar_select %p201, %s198, 7
      %s203 = smul.addr %s200, 8
      %s204 = sadd.s32 %s202, %s203
      %s205 = smul.addr %s204, 8
      %s206 = scalar_lea.vmem %s1, %s205
      %s207 = smul.u32 4, %s20
      %p208 = scmp.lt.s32.totalorder %s18, 3
      %s209 = scalar_select %p208, %s18, 3
      %s210 = scalar_lea.vmem %s2, %s209
      %p211 = scmp.eq.s32.totalorder %s19, 0
      %p212 = scmp.eq.s32.totalorder %s20, 0
      %p213 = pnand %p211, %p212
      %p214 = pneg %p213
      // Predicated region
      $region29: #{tpu_custom_call.1} parent=27 // pred_check
        _
      $region30: #{tpu_custom_call.1} parent=27 // pred_check_branch
        %216 = sbr.rel (%p213) target = $region32
      $region31: #{tpu_custom_call.1} parent=27 // pred_region
        %vm217 = vcmask 0
        %218 = vst.msk [vmem:[#allocation2] sm:$0x1] %vm217, -1.0
      $region32: #{tpu_custom_call.1} parent=27 // pred_fallthru
        _
      %v219 = vld [vmem:[%s196] sm:$0xff]
      %v220 = vld [vmem:[%s196 + $0x8] sm:$0xff]
      %v221 = vld [vmem:[%s196 + $0x10] sm:$0xff]
      %v222 = vld [vmem:[%s196 + $0x18] sm:$0xff]
      %v223 = vld [vmem:[%s196 + $0x20] sm:$0xff]
      %v224 = vld [vmem:[%s196 + $0x28] sm:$0xff]
      %v225 = vld [vmem:[%s196 + $0x30] sm:$0xff]
      %v226 = vld [vmem:[%s196 + $0x38] sm:$0xff]
      %v227 = vld [vmem:[%s196 + $0x40] sm:$0xff]
      %v228 = vld [vmem:[%s196 + $0x48] sm:$0xff]
      %v229 = vld [vmem:[%s196 + $0x50] sm:$0xff]
      %v230 = vld [vmem:[%s196 + $0x58] sm:$0xff]
      %v231 = vld [vmem:[%s196 + $0x60] sm:$0xff]
      %v232 = vld [vmem:[%s196 + $0x68] sm:$0xff]
      %v233 = vld [vmem:[%s196 + $0x70] sm:$0xff]
      %v234 = vld [vmem:[%s196 + $0x78] sm:$0xff]
      %v235 = vld [vmem:[%s196 + $0x80] sm:$0xff]
      %v236 = vld [vmem:[%s196 + $0x88] sm:$0xff]
      %v237 = vld [vmem:[%s196 + $0x90] sm:$0xff]
      %v238 = vld [vmem:[%s196 + $0x98] sm:$0xff]
      %v239 = vld [vmem:[%s196 + $0xa0] sm:$0xff]
      %v240 = vld [vmem:[%s196 + $0xa8] sm:$0xff]
      %v241 = vld [vmem:[%s196 + $0xb0] sm:$0xff]
      %v242 = vld [vmem:[%s196 + $0xb8] sm:$0xff]
      %v243 = vld [vmem:[%s196 + $0xc0] sm:$0xff]
      %v244 = vld [vmem:[%s196 + $0xc8] sm:$0xff]
      %v245 = vld [vmem:[%s196 + $0xd0] sm:$0xff]
      %v246 = vld [vmem:[%s196 + $0xd8] sm:$0xff]
      %v247 = vld [vmem:[%s196 + $0xe0] sm:$0xff]
      %v248 = vld [vmem:[%s196 + $0xe8] sm:$0xff]
      %v249 = vld [vmem:[%s196 + $0xf0] sm:$0xff]
      %v250 = vld [vmem:[%s196 + $0xf8] sm:$0xff]
      %v251 = vld [vmem:[%s206] sm:$0xff]
      %v252 = vld [vmem:[%s206 + $0x8] sm:$0xff]
      %v253 = vld [vmem:[%s206 + $0x10] sm:$0xff]
      %v254 = vld [vmem:[%s206 + $0x18] sm:$0xff]
      %vm255 = vcmask 64512
      %v257 = vsel %vm255, %v219, 0
      %v260 = vsel %vm255, %v220, 0
      %v263 = vsel %vm255, %v221, 0
      %v266 = vsel %vm255, %v222, 0
      %v269 = vsel %vm255, %v223, 0
      %v272 = vsel %vm255, %v224, 0
      %v275 = vsel %vm255, %v225, 0
      %v278 = vsel %vm255, %v226, 0
      %v281 = vsel %vm255, %v227, 0
      %v284 = vsel %vm255, %v228, 0
      %v287 = vsel %vm255, %v229, 0
      %v290 = vsel %vm255, %v230, 0
      %v293 = vsel %vm255, %v231, 0
      %v296 = vsel %vm255, %v232, 0
      %v299 = vsel %vm255, %v233, 0
      %v302 = vsel %vm255, %v234, 0
      %v305 = vsel %vm255, %v235, 0
      %v308 = vsel %vm255, %v236, 0
      %v311 = vsel %vm255, %v237, 0
      %v314 = vsel %vm255, %v238, 0
      %v317 = vsel %vm255, %v239, 0
      %v320 = vsel %vm255, %v240, 0
      %v323 = vsel %vm255, %v241, 0
      %v326 = vsel %vm255, %v242, 0
      %v329 = vsel %vm255, %v243, 0
      %v332 = vsel %vm255, %v244, 0
      %v335 = vsel %vm255, %v245, 0
      %v338 = vsel %vm255, %v246, 0
      %v341 = vsel %vm255, %v247, 0
      %v344 = vsel %vm255, %v248, 0
      %v347 = vsel %vm255, %v249, 0
      %v350 = vsel %vm255, %v250, 0
      %352 = vmatpush.msra.mxu0 0.0
      %353 = vmatpush.msra.mxu0 0.0
      %354 = vmatpush.msra.mxu0 0.0
      %355 = vmatpush.msra.mxu0 0.0
      %356 = vmatpush.msra.mxu0 0.0
      %357 = vmatpush.msra.mxu0 0.0
      %358 = vmatpush.msra.mxu0 0.0
      %359 = vmatpush.msra.mxu0 0.0
      %360 = vmatpush.msra.mxu0 0.0
      %361 = vmatpush.msra.mxu0 0.0
      %362 = vmatpush.msra.mxu0 0.0
      %363 = vmatpush.msra.mxu0 0.0
      %364 = vmatpush.msra.mxu0 0.0
      %365 = vmatpush.msra.mxu0 0.0
      %366 = vmatpush.msra.mxu0 0.0
      %367 = vmatpush.msra.mxu0 %v251
      %368 = vmatmul.f32.gmra.mxu0 %v257
      %v369 = vpop.f32.mrf.mxu0
      %v370 = vadd.f32 0.0, %v369
      %371 = vmatmul.f32.gmra.mxu0 %v260
      %v372 = vpop.f32.mrf.mxu0
      %v373 = vadd.f32 0.0, %v372
      %374 = vmatmul.f32.gmra.mxu0 %v263
      %v375 = vpop.f32.mrf.mxu0
      %v376 = vadd.f32 0.0, %v375
      %377 = vmatmul.f32.gmra.mxu0 %v266
      %v378 = vpop.f32.mrf.mxu0
      %v379 = vadd.f32 0.0, %v378
      %380 = vmatmul.f32.gmra.mxu0 %v269
      %v381 = vpop.f32.mrf.mxu0
      %v382 = vadd.f32 0.0, %v381
      %383 = vmatmul.f32.gmra.mxu0 %v272
      %v384 = vpop.f32.mrf.mxu0
      %v385 = vadd.f32 0.0, %v384
      %386 = vmatmul.f32.gmra.mxu0 %v275
      %v387 = vpop.f32.mrf.mxu0
      %v388 = vadd.f32 0.0, %v387
      %389 = vmatmul.f32.gmra.mxu0 %v278
      %v390 = vpop.f32.mrf.mxu0
      %v391 = vadd.f32 0.0, %v390
      %392 = vmatmul.f32.gmra.mxu0 %v281
      %v393 = vpop.f32.mrf.mxu0
      %v394 = vadd.f32 0.0, %v393
      %395 = vmatmul.f32.gmra.mxu0 %v284
      %v396 = vpop.f32.mrf.mxu0
      %v397 = vadd.f32 0.0, %v396
      %398 = vmatmul.f32.gmra.mxu0 %v287
      %v399 = vpop.f32.mrf.mxu0
      %v400 = vadd.f32 0.0, %v399
      %401 = vmatmul.f32.gmra.mxu0 %v290
      %v402 = vpop.f32.mrf.mxu0
      %v403 = vadd.f32 0.0, %v402
      %404 = vmatmul.f32.gmra.mxu0 %v293
      %v405 = vpop.f32.mrf.mxu0
      %v406 = vadd.f32 0.0, %v405
      %407 = vmatmul.f32.gmra.mxu0 %v296
      %v408 = vpop.f32.mrf.mxu0
      %v409 = vadd.f32 0.0, %v408
      %410 = vmatmul.f32.gmra.mxu0 %v299
      %v411 = vpop.f32.mrf.mxu0
      %v412 = vadd.f32 0.0, %v411
      %413 = vmatmul.f32.gmra.mxu0 %v302
      %v414 = vpop.f32.mrf.mxu0
      %v415 = vadd.f32 0.0, %v414
      %416 = vmatmul.f32.gmra.mxu0 %v305
      %v417 = vpop.f32.mrf.mxu0
      %v418 = vadd.f32 0.0, %v417
      %419 = vmatmul.f32.gmra.mxu0 %v308
      %v420 = vpop.f32.mrf.mxu0
      %v421 = vadd.f32 0.0, %v420
      %422 = vmatmul.f32.gmra.mxu0 %v311
      %v423 = vpop.f32.mrf.mxu0
      %v424 = vadd.f32 0.0, %v423
      %425 = vmatmul.f32.gmra.mxu0 %v314
      %v426 = vpop.f32.mrf.mxu0
      %v427 = vadd.f32 0.0, %v426
      %428 = vmatmul.f32.gmra.mxu0 %v317
      %v429 = vpop.f32.mrf.mxu0
      %v430 = vadd.f32 0.0, %v429
      %431 = vmatmul.f32.gmra.mxu0 %v320
      %v432 = vpop.f32.mrf.mxu0
      %v433 = vadd.f32 0.0, %v432
      %434 = vmatmul.f32.gmra.mxu0 %v323
      %v435 = vpop.f32.mrf.mxu0
      %v436 = vadd.f32 0.0, %v435
      %437 = vmatmul.f32.gmra.mxu0 %v326
      %v438 = vpop.f32.mrf.mxu0
      %v439 = vadd.f32 0.0, %v438
      %440 = vmatmul.f32.gmra.mxu0 %v329
      %v441 = vpop.f32.mrf.mxu0
      %v442 = vadd.f32 0.0, %v441
      %443 = vmatmul.f32.gmra.mxu0 %v332
      %v444 = vpop.f32.mrf.mxu0
      %v445 = vadd.f32 0.0, %v444
      %446 = vmatmul.f32.gmra.mxu0 %v335
      %v447 = vpop.f32.mrf.mxu0
      %v448 = vadd.f32 0.0, %v447
      %449 = vmatmul.f32.gmra.mxu0 %v338
      %v450 = vpop.f32.mrf.mxu0
      %v451 = vadd.f32 0.0, %v450
      %452 = vmatmul.f32.gmra.mxu0 %v341
      %v453 = vpop.f32.mrf.mxu0
      %v454 = vadd.f32 0.0, %v453
      %455 = vmatmul.f32.gmra.mxu0 %v344
      %v456 = vpop.f32.mrf.mxu0
      %v457 = vadd.f32 0.0, %v456
      %458 = vmatmul.f32.gmra.mxu0 %v347
      %v459 = vpop.f32.mrf.mxu0
      %v460 = vadd.f32 0.0, %v459
      %461 = vmatmul.f32.gmra.mxu0 %v350
      %v462 = vpop.f32.mrf.mxu0
      %v463 = vadd.f32 0.0, %v462
      %464 = vdwg.mxu0
      %465 = vmatpush.msra.mxu0 0.0
      %466 = vmatpush.msra.mxu0 0.0
      %467 = vmatpush.msra.mxu0 0.0
      %468 = vmatpush.msra.mxu0 0.0
      %469 = vmatpush.msra.mxu0 0.0
      %470 = vmatpush.msra.mxu0 0.0
      %471 = vmatpush.msra.mxu0 0.0
      %472 = vmatpush.msra.mxu0 0.0
      %473 = vmatpush.msra.mxu0 0.0
      %474 = vmatpush.msra.mxu0 0.0
      %475 = vmatpush.msra.mxu0 0.0
      %476 = vmatpush.msra.mxu0 0.0
      %477 = vmatpush.msra.mxu0 0.0
      %478 = vmatpush.msra.mxu0 0.0
      %479 = vmatpush.msra.mxu0 0.0
      %480 = vmatpush.msra.mxu0 %v252
      %481 = vmatmul.f32.gmra.mxu0 %v257
      %v482 = vpop.f32.mrf.mxu0
      %v483 = vadd.f32 0.0, %v482
      %484 = vmatmul.f32.gmra.mxu0 %v260
      %v485 = vpop.f32.mrf.mxu0
      %v486 = vadd.f32 0.0, %v485
      %487 = vmatmul.f32.gmra.mxu0 %v263
      %v488 = vpop.f32.mrf.mxu0
      %v489 = vadd.f32 0.0, %v488
      %490 = vmatmul.f32.gmra.mxu0 %v266
      %v491 = vpop.f32.mrf.mxu0
      %v492 = vadd.f32 0.0, %v491
      %493 = vmatmul.f32.gmra.mxu0 %v269
      %v494 = vpop.f32.mrf.mxu0
      %v495 = vadd.f32 0.0, %v494
      %496 = vmatmul.f32.gmra.mxu0 %v272
      %v497 = vpop.f32.mrf.mxu0
      %v498 = vadd.f32 0.0, %v497
      %499 = vmatmul.f32.gmra.mxu0 %v275
      %v500 = vpop.f32.mrf.mxu0
      %v501 = vadd.f32 0.0, %v500
      %502 = vmatmul.f32.gmra.mxu0 %v278
      %v503 = vpop.f32.mrf.mxu0
      %v504 = vadd.f32 0.0, %v503
      %505 = vmatmul.f32.gmra.mxu0 %v281
      %v506 = vpop.f32.mrf.mxu0
      %v507 = vadd.f32 0.0, %v506
      %508 = vmatmul.f32.gmra.mxu0 %v284
      %v509 = vpop.f32.mrf.mxu0
      %v510 = vadd.f32 0.0, %v509
      %511 = vmatmul.f32.gmra.mxu0 %v287
      %v512 = vpop.f32.mrf.mxu0
      %v513 = vadd.f32 0.0, %v512
      %514 = vmatmul.f32.gmra.mxu0 %v290
      %v515 = vpop.f32.mrf.mxu0
      %v516 = vadd.f32 0.0, %v515
      %517 = vmatmul.f32.gmra.mxu0 %v293
      %v518 = vpop.f32.mrf.mxu0
      %v519 = vadd.f32 0.0, %v518
      %520 = vmatmul.f32.gmra.mxu0 %v296
      %v521 = vpop.f32.mrf.mxu0
      %v522 = vadd.f32 0.0, %v521
      %523 = vmatmul.f32.gmra.mxu0 %v299
      %v524 = vpop.f32.mrf.mxu0
      %v525 = vadd.f32 0.0, %v524
      %526 = vmatmul.f32.gmra.mxu0 %v302
      %v527 = vpop.f32.mrf.mxu0
      %v528 = vadd.f32 0.0, %v527
      %529 = vmatmul.f32.gmra.mxu0 %v305
      %v530 = vpop.f32.mrf.mxu0
      %v531 = vadd.f32 0.0, %v530
      %532 = vmatmul.f32.gmra.mxu0 %v308
      %v533 = vpop.f32.mrf.mxu0
      %v534 = vadd.f32 0.0, %v533
      %535 = vmatmul.f32.gmra.mxu0 %v311
      %v536 = vpop.f32.mrf.mxu0
      %v537 = vadd.f32 0.0, %v536
      %538 = vmatmul.f32.gmra.mxu0 %v314
      %v539 = vpop.f32.mrf.mxu0
      %v540 = vadd.f32 0.0, %v539
      %541 = vmatmul.f32.gmra.mxu0 %v317
      %v542 = vpop.f32.mrf.mxu0
      %v543 = vadd.f32 0.0, %v542
      %544 = vmatmul.f32.gmra.mxu0 %v320
      %v545 = vpop.f32.mrf.mxu0
      %v546 = vadd.f32 0.0, %v545
      %547 = vmatmul.f32.gmra.mxu0 %v323
      %v548 = vpop.f32.mrf.mxu0
      %v549 = vadd.f32 0.0, %v548
      %550 = vmatmul.f32.gmra.mxu0 %v326
      %v551 = vpop.f32.mrf.mxu0
      %v552 = vadd.f32 0.0, %v551
      %553 = vmatmul.f32.gmra.mxu0 %v329
      %v554 = vpop.f32.mrf.mxu0
      %v555 = vadd.f32 0.0, %v554
      %556 = vmatmul.f32.gmra.mxu0 %v332
      %v557 = vpop.f32.mrf.mxu0
      %v558 = vadd.f32 0.0, %v557
      %559 = vmatmul.f32.gmra.mxu0 %v335
      %v560 = vpop.f32.mrf.mxu0
      %v561 = vadd.f32 0.0, %v560
      %562 = vmatmul.f32.gmra.mxu0 %v338
      %v563 = vpop.f32.mrf.mxu0
      %v564 = vadd.f32 0.0, %v563
      %565 = vmatmul.f32.gmra.mxu0 %v341
      %v566 = vpop.f32.mrf.mxu0
      %v567 = vadd.f32 0.0, %v566
      %568 = vmatmul.f32.gmra.mxu0 %v344
      %v569 = vpop.f32.mrf.mxu0
      %v570 = vadd.f32 0.0, %v569
      %571 = vmatmul.f32.gmra.mxu0 %v347
      %v572 = vpop.f32.mrf.mxu0
      %v573 = vadd.f32 0.0, %v572
      %574 = vmatmul.f32.gmra.mxu0 %v350
      %v575 = vpop.f32.mrf.mxu0
      %v576 = vadd.f32 0.0, %v575
      %577 = vdwg.mxu0
      %578 = vmatpush.msra.mxu0 0.0
      %579 = vmatpush.msra.mxu0 0.0
      %580 = vmatpush.msra.mxu0 0.0
      %581 = vmatpush.msra.mxu0 0.0
      %582 = vmatpush.msra.mxu0 0.0
      %583 = vmatpush.msra.mxu0 0.0
      %584 = vmatpush.msra.mxu0 0.0
      %585 = vmatpush.msra.mxu0 0.0
      %586 = vmatpush.msra.mxu0 0.0
      %587 = vmatpush.msra.mxu0 0.0
      %588 = vmatpush.msra.mxu0 0.0
      %589 = vmatpush.msra.mxu0 0.0
      %590 = vmatpush.msra.mxu0 0.0
      %591 = vmatpush.msra.mxu0 0.0
      %592 = vmatpush.msra.mxu0 0.0
      %593 = vmatpush.msra.mxu0 %v253
      %594 = vmatmul.f32.gmra.mxu0 %v257
      %v595 = vpop.f32.mrf.mxu0
      %v596 = vadd.f32 0.0, %v595
      %597 = vmatmul.f32.gmra.mxu0 %v260
      %v598 = vpop.f32.mrf.mxu0
      %v599 = vadd.f32 0.0, %v598
      %600 = vmatmul.f32.gmra.mxu0 %v263
      %v601 = vpop.f32.mrf.mxu0
      %v602 = vadd.f32 0.0, %v601
      %603 = vmatmul.f32.gmra.mxu0 %v266
      %v604 = vpop.f32.mrf.mxu0
      %v605 = vadd.f32 0.0, %v604
      %606 = vmatmul.f32.gmra.mxu0 %v269
      %v607 = vpop.f32.mrf.mxu0
      %v608 = vadd.f32 0.0, %v607
      %609 = vmatmul.f32.gmra.mxu0 %v272
      %v610 = vpop.f32.mrf.mxu0
      %v611 = vadd.f32 0.0, %v610
      %612 = vmatmul.f32.gmra.mxu0 %v275
      %v613 = vpop.f32.mrf.mxu0
      %v614 = vadd.f32 0.0, %v613
      %615 = vmatmul.f32.gmra.mxu0 %v278
      %v616 = vpop.f32.mrf.mxu0
      %v617 = vadd.f32 0.0, %v616
      %618 = vmatmul.f32.gmra.mxu0 %v281
      %v619 = vpop.f32.mrf.mxu0
      %v620 = vadd.f32 0.0, %v619
      %621 = vmatmul.f32.gmra.mxu0 %v284
      %v622 = vpop.f32.mrf.mxu0
      %v623 = vadd.f32 0.0, %v622
      %624 = vmatmul.f32.gmra.mxu0 %v287
      %v625 = vpop.f32.mrf.mxu0
      %v626 = vadd.f32 0.0, %v625
      %627 = vmatmul.f32.gmra.mxu0 %v290
      %v628 = vpop.f32.mrf.mxu0
      %v629 = vadd.f32 0.0, %v628
      %630 = vmatmul.f32.gmra.mxu0 %v293
      %v631 = vpop.f32.mrf.mxu0
      %v632 = vadd.f32 0.0, %v631
      %633 = vmatmul.f32.gmra.mxu0 %v296
      %v634 = vpop.f32.mrf.mxu0
      %v635 = vadd.f32 0.0, %v634
      %636 = vmatmul.f32.gmra.mxu0 %v299
      %v637 = vpop.f32.mrf.mxu0
      %v638 = vadd.f32 0.0, %v637
      %639 = vmatmul.f32.gmra.mxu0 %v302
      %v640 = vpop.f32.mrf.mxu0
      %v641 = vadd.f32 0.0, %v640
      %642 = vmatmul.f32.gmra.mxu0 %v305
      %v643 = vpop.f32.mrf.mxu0
      %v644 = vadd.f32 0.0, %v643
      %645 = vmatmul.f32.gmra.mxu0 %v308
      %v646 = vpop.f32.mrf.mxu0
      %v647 = vadd.f32 0.0, %v646
      %648 = vmatmul.f32.gmra.mxu0 %v311
      %v649 = vpop.f32.mrf.mxu0
      %v650 = vadd.f32 0.0, %v649
      %651 = vmatmul.f32.gmra.mxu0 %v314
      %v652 = vpop.f32.mrf.mxu0
      %v653 = vadd.f32 0.0, %v652
      %654 = vmatmul.f32.gmra.mxu0 %v317
      %v655 = vpop.f32.mrf.mxu0
      %v656 = vadd.f32 0.0, %v655
      %657 = vmatmul.f32.gmra.mxu0 %v320
      %v658 = vpop.f32.mrf.mxu0
      %v659 = vadd.f32 0.0, %v658
      %660 = vmatmul.f32.gmra.mxu0 %v323
      %v661 = vpop.f32.mrf.mxu0
      %v662 = vadd.f32 0.0, %v661
      %663 = vmatmul.f32.gmra.mxu0 %v326
      %v664 = vpop.f32.mrf.mxu0
      %v665 = vadd.f32 0.0, %v664
      %666 = vmatmul.f32.gmra.mxu0 %v329
      %v667 = vpop.f32.mrf.mxu0
      %v668 = vadd.f32 0.0, %v667
      %669 = vmatmul.f32.gmra.mxu0 %v332
      %v670 = vpop.f32.mrf.mxu0
      %v671 = vadd.f32 0.0, %v670
      %672 = vmatmul.f32.gmra.mxu0 %v335
      %v673 = vpop.f32.mrf.mxu0
      %v674 = vadd.f32 0.0, %v673
      %675 = vmatmul.f32.gmra.mxu0 %v338
      %v676 = vpop.f32.mrf.mxu0
      %v677 = vadd.f32 0.0, %v676
      %678 = vmatmul.f32.gmra.mxu0 %v341
      %v679 = vpop.f32.mrf.mxu0
      %v680 = vadd.f32 0.0, %v679
      %681 = vmatmul.f32.gmra.mxu0 %v344
      %v682 = vpop.f32.mrf.mxu0
      %v683 = vadd.f32 0.0, %v682
      %684 = vmatmul.f32.gmra.mxu0 %v347
      %v685 = vpop.f32.mrf.mxu0
      %v686 = vadd.f32 0.0, %v685
      %687 = vmatmul.f32.gmra.mxu0 %v350
      %v688 = vpop.f32.mrf.mxu0
      %v689 = vadd.f32 0.0, %v688
      %690 = vdwg.mxu0
      %691 = vmatpush.msra.mxu0 0.0
      %692 = vmatpush.msra.mxu0 0.0
      %693 = vmatpush.msra.mxu0 0.0
      %694 = vmatpush.msra.mxu0 0.0
      %695 = vmatpush.msra.mxu0 0.0
      %696 = vmatpush.msra.mxu0 0.0
      %697 = vmatpush.msra.mxu0 0.0
      %698 = vmatpush.msra.mxu0 0.0
      %699 = vmatpush.msra.mxu0 0.0
      %700 = vmatpush.msra.mxu0 0.0
      %701 = vmatpush.msra.mxu0 0.0
      %702 = vmatpush.msra.mxu0 0.0
      %703 = vmatpush.msra.mxu0 0.0
      %704 = vmatpush.msra.mxu0 0.0
      %705 = vmatpush.msra.mxu0 0.0
      %706 = vmatpush.msra.mxu0 %v254
      %707 = vmatmul.f32.gmra.mxu0 %v257
      %v708 = vpop.f32.mrf.mxu0
      %v709 = vadd.f32 0.0, %v708
      %710 = vmatmul.f32.gmra.mxu0 %v260
      %v711 = vpop.f32.mrf.mxu0
      %v712 = vadd.f32 0.0, %v711
      %713 = vmatmul.f32.gmra.mxu0 %v263
      %v714 = vpop.f32.mrf.mxu0
      %v715 = vadd.f32 0.0, %v714
      %716 = vmatmul.f32.gmra.mxu0 %v266
      %v717 = vpop.f32.mrf.mxu0
      %v718 = vadd.f32 0.0, %v717
      %719 = vmatmul.f32.gmra.mxu0 %v269
      %v720 = vpop.f32.mrf.mxu0
      %v721 = vadd.f32 0.0, %v720
      %722 = vmatmul.f32.gmra.mxu0 %v272
      %v723 = vpop.f32.mrf.mxu0
      %v724 = vadd.f32 0.0, %v723
      %725 = vmatmul.f32.gmra.mxu0 %v275
      %v726 = vpop.f32.mrf.mxu0
      %v727 = vadd.f32 0.0, %v726
      %728 = vmatmul.f32.gmra.mxu0 %v278
      %v729 = vpop.f32.mrf.mxu0
      %v730 = vadd.f32 0.0, %v729
      %731 = vmatmul.f32.gmra.mxu0 %v281
      %v732 = vpop.f32.mrf.mxu0
      %v733 = vadd.f32 0.0, %v732
      %734 = vmatmul.f32.gmra.mxu0 %v284
      %v735 = vpop.f32.mrf.mxu0
      %v736 = vadd.f32 0.0, %v735
      %737 = vmatmul.f32.gmra.mxu0 %v287
      %v738 = vpop.f32.mrf.mxu0
      %v739 = vadd.f32 0.0, %v738
      %740 = vmatmul.f32.gmra.mxu0 %v290
      %v741 = vpop.f32.mrf.mxu0
      %v742 = vadd.f32 0.0, %v741
      %743 = vmatmul.f32.gmra.mxu0 %v293
      %v744 = vpop.f32.mrf.mxu0
      %v745 = vadd.f32 0.0, %v744
      %746 = vmatmul.f32.gmra.mxu0 %v296
      %v747 = vpop.f32.mrf.mxu0
      %v748 = vadd.f32 0.0, %v747
      %749 = vmatmul.f32.gmra.mxu0 %v299
      %v750 = vpop.f32.mrf.mxu0
      %v751 = vadd.f32 0.0, %v750
      %752 = vmatmul.f32.gmra.mxu0 %v302
      %v753 = vpop.f32.mrf.mxu0
      %v754 = vadd.f32 0.0, %v753
      %755 = vmatmul.f32.gmra.mxu0 %v305
      %v756 = vpop.f32.mrf.mxu0
      %v757 = vadd.f32 0.0, %v756
      %758 = vmatmul.f32.gmra.mxu0 %v308
      %v759 = vpop.f32.mrf.mxu0
      %v760 = vadd.f32 0.0, %v759
      %761 = vmatmul.f32.gmra.mxu0 %v311
      %v762 = vpop.f32.mrf.mxu0
      %v763 = vadd.f32 0.0, %v762
      %764 = vmatmul.f32.gmra.mxu0 %v314
      %v765 = vpop.f32.mrf.mxu0
      %v766 = vadd.f32 0.0, %v765
      %767 = vmatmul.f32.gmra.mxu0 %v317
      %v768 = vpop.f32.mrf.mxu0
      %v769 = vadd.f32 0.0, %v768
      %770 = vmatmul.f32.gmra.mxu0 %v320
      %v771 = vpop.f32.mrf.mxu0
      %v772 = vadd.f32 0.0, %v771
      %773 = vmatmul.f32.gmra.mxu0 %v323
      %v774 = vpop.f32.mrf.mxu0
      %v775 = vadd.f32 0.0, %v774
      %776 = vmatmul.f32.gmra.mxu0 %v326
      %v777 = vpop.f32.mrf.mxu0
      %v778 = vadd.f32 0.0, %v777
      %779 = vmatmul.f32.gmra.mxu0 %v329
      %v780 = vpop.f32.mrf.mxu0
      %v781 = vadd.f32 0.0, %v780
      %782 = vmatmul.f32.gmra.mxu0 %v332
      %v783 = vpop.f32.mrf.mxu0
      %v784 = vadd.f32 0.0, %v783
      %785 = vmatmul.f32.gmra.mxu0 %v335
      %v786 = vpop.f32.mrf.mxu0
      %v787 = vadd.f32 0.0, %v786
      %788 = vmatmul.f32.gmra.mxu0 %v338
      %v789 = vpop.f32.mrf.mxu0
      %v790 = vadd.f32 0.0, %v789
      %791 = vmatmul.f32.gmra.mxu0 %v341
      %v792 = vpop.f32.mrf.mxu0
      %v793 = vadd.f32 0.0, %v792
      %794 = vmatmul.f32.gmra.mxu0 %v344
      %v795 = vpop.f32.mrf.mxu0
      %v796 = vadd.f32 0.0, %v795
      %797 = vmatmul.f32.gmra.mxu0 %v347
      %v798 = vpop.f32.mrf.mxu0
      %v799 = vadd.f32 0.0, %v798
      %800 = vmatmul.f32.gmra.mxu0 %v350
      %v801 = vpop.f32.mrf.mxu0
      %v802 = vadd.f32 0.0, %v801
      %803 = vdwg.mxu0
      %v804 = vmin.f32 %v370, %v483
      %v805 = vmin.f32 %v804, %v596
      %v806 = vmin.f32 %v805, %v709
      %807 = vmin.xlane.f32.xlu0 %v806
      %v808 = vpop.xlane.xlu0 %807
      %v809 = vmin.f32 %v373, %v486
      %v810 = vmin.f32 %v809, %v599
      %v811 = vmin.f32 %v810, %v712
      %812 = vmin.xlane.f32.xlu0 %v811
      %v813 = vpop.xlane.xlu0 %812
      %v814 = vmin.f32 %v376, %v489
      %v815 = vmin.f32 %v814, %v602
      %v816 = vmin.f32 %v815, %v715
      %817 = vmin.xlane.f32.xlu0 %v816
      %v818 = vpop.xlane.xlu0 %817
      %v819 = vmin.f32 %v379, %v492
      %v820 = vmin.f32 %v819, %v605
      %v821 = vmin.f32 %v820, %v718
      %822 = vmin.xlane.f32.xlu0 %v821
      %v823 = vpop.xlane.xlu0 %822
      %v824 = vmin.f32 %v382, %v495
      %v825 = vmin.f32 %v824, %v608
      %v826 = vmin.f32 %v825, %v721
      %827 = vmin.xlane.f32.xlu0 %v826
      %v828 = vpop.xlane.xlu0 %827
      %v829 = vmin.f32 %v385, %v498
      %v830 = vmin.f32 %v829, %v611
      %v831 = vmin.f32 %v830, %v724
      %832 = vmin.xlane.f32.xlu0 %v831
      %v833 = vpop.xlane.xlu0 %832
      %v834 = vmin.f32 %v388, %v501
      %v835 = vmin.f32 %v834, %v614
      %v836 = vmin.f32 %v835, %v727
      %837 = vmin.xlane.f32.xlu0 %v836
      %v838 = vpop.xlane.xlu0 %837
      %v839 = vmin.f32 %v391, %v504
      %v840 = vmin.f32 %v839, %v617
      %v841 = vmin.f32 %v840, %v730
      %842 = vmin.xlane.f32.xlu0 %v841
      %v843 = vpop.xlane.xlu0 %842
      %v844 = vmin.f32 %v394, %v507
      %v845 = vmin.f32 %v844, %v620
      %v846 = vmin.f32 %v845, %v733
      %847 = vmin.xlane.f32.xlu0 %v846
      %v848 = vpop.xlane.xlu0 %847
      %v849 = vmin.f32 %v397, %v510
      %v850 = vmin.f32 %v849, %v623
      %v851 = vmin.f32 %v850, %v736
      %852 = vmin.xlane.f32.xlu0 %v851
      %v853 = vpop.xlane.xlu0 %852
      %v854 = vmin.f32 %v400, %v513
      %v855 = vmin.f32 %v854, %v626
      %v856 = vmin.f32 %v855, %v739
      %857 = vmin.xlane.f32.xlu0 %v856
      %v858 = vpop.xlane.xlu0 %857
      %v859 = vmin.f32 %v403, %v516
      %v860 = vmin.f32 %v859, %v629
      %v861 = vmin.f32 %v860, %v742
      %862 = vmin.xlane.f32.xlu0 %v861
      %v863 = vpop.xlane.xlu0 %862
      %v864 = vmin.f32 %v406, %v519
      %v865 = vmin.f32 %v864, %v632
      %v866 = vmin.f32 %v865, %v745
      %867 = vmin.xlane.f32.xlu0 %v866
      %v868 = vpop.xlane.xlu0 %867
      %v869 = vmin.f32 %v409, %v522
      %v870 = vmin.f32 %v869, %v635
      %v871 = vmin.f32 %v870, %v748
      %872 = vmin.xlane.f32.xlu0 %v871
      %v873 = vpop.xlane.xlu0 %872
      %v874 = vmin.f32 %v412, %v525
      %v875 = vmin.f32 %v874, %v638
      %v876 = vmin.f32 %v875, %v751
      %877 = vmin.xlane.f32.xlu0 %v876
      %v878 = vpop.xlane.xlu0 %877
      %v879 = vmin.f32 %v415, %v528
      %v880 = vmin.f32 %v879, %v641
      %v881 = vmin.f32 %v880, %v754
      %882 = vmin.xlane.f32.xlu0 %v881
      %v883 = vpop.xlane.xlu0 %882
      %v884 = vmin.f32 %v418, %v531
      %v885 = vmin.f32 %v884, %v644
      %v886 = vmin.f32 %v885, %v757
      %887 = vmin.xlane.f32.xlu0 %v886
      %v888 = vpop.xlane.xlu0 %887
      %v889 = vmin.f32 %v421, %v534
      %v890 = vmin.f32 %v889, %v647
      %v891 = vmin.f32 %v890, %v760
      %892 = vmin.xlane.f32.xlu0 %v891
      %v893 = vpop.xlane.xlu0 %892
      %v894 = vmin.f32 %v424, %v537
      %v895 = vmin.f32 %v894, %v650
      %v896 = vmin.f32 %v895, %v763
      %897 = vmin.xlane.f32.xlu0 %v896
      %v898 = vpop.xlane.xlu0 %897
      %v899 = vmin.f32 %v427, %v540
      %v900 = vmin.f32 %v899, %v653
      %v901 = vmin.f32 %v900, %v766
      %902 = vmin.xlane.f32.xlu0 %v901
      %v903 = vpop.xlane.xlu0 %902
      %v904 = vmin.f32 %v430, %v543
      %v905 = vmin.f32 %v904, %v656
      %v906 = vmin.f32 %v905, %v769
      %907 = vmin.xlane.f32.xlu0 %v906
      %v908 = vpop.xlane.xlu0 %907
      %v909 = vmin.f32 %v433, %v546
      %v910 = vmin.f32 %v909, %v659
      %v911 = vmin.f32 %v910, %v772
      %912 = vmin.xlane.f32.xlu0 %v911
      %v913 = vpop.xlane.xlu0 %912
      %v914 = vmin.f32 %v436, %v549
      %v915 = vmin.f32 %v914, %v662
      %v916 = vmin.f32 %v915, %v775
      %917 = vmin.xlane.f32.xlu0 %v916
      %v918 = vpop.xlane.xlu0 %917
      %v919 = vmin.f32 %v439, %v552
      %v920 = vmin.f32 %v919, %v665
      %v921 = vmin.f32 %v920, %v778
      %922 = vmin.xlane.f32.xlu0 %v921
      %v923 = vpop.xlane.xlu0 %922
      %v924 = vmin.f32 %v442, %v555
      %v925 = vmin.f32 %v924, %v668
      %v926 = vmin.f32 %v925, %v781
      %927 = vmin.xlane.f32.xlu0 %v926
      %v928 = vpop.xlane.xlu0 %927
      %v929 = vmin.f32 %v445, %v558
      %v930 = vmin.f32 %v929, %v671
      %v931 = vmin.f32 %v930, %v784
      %932 = vmin.xlane.f32.xlu0 %v931
      %v933 = vpop.xlane.xlu0 %932
      %v934 = vmin.f32 %v448, %v561
      %v935 = vmin.f32 %v934, %v674
      %v936 = vmin.f32 %v935, %v787
      %937 = vmin.xlane.f32.xlu0 %v936
      %v938 = vpop.xlane.xlu0 %937
      %v939 = vmin.f32 %v451, %v564
      %v940 = vmin.f32 %v939, %v677
      %v941 = vmin.f32 %v940, %v790
      %942 = vmin.xlane.f32.xlu0 %v941
      %v943 = vpop.xlane.xlu0 %942
      %v944 = vmin.f32 %v454, %v567
      %v945 = vmin.f32 %v944, %v680
      %v946 = vmin.f32 %v945, %v793
      %947 = vmin.xlane.f32.xlu0 %v946
      %v948 = vpop.xlane.xlu0 %947
      %v949 = vmin.f32 %v457, %v570
      %v950 = vmin.f32 %v949, %v683
      %v951 = vmin.f32 %v950, %v796
      %952 = vmin.xlane.f32.xlu0 %v951
      %v953 = vpop.xlane.xlu0 %952
      %v954 = vmin.f32 %v460, %v573
      %v955 = vmin.f32 %v954, %v686
      %v956 = vmin.f32 %v955, %v799
      %957 = vmin.xlane.f32.xlu0 %v956
      %v958 = vpop.xlane.xlu0 %957
      %v959 = vmin.f32 %v463, %v576
      %v960 = vmin.f32 %v959, %v689
      %v961 = vmin.f32 %v960, %v802
      %962 = vmin.xlane.f32.xlu0 %v961
      %v963 = vpop.xlane.xlu0 %962
      // Predicated region
      $region33: #{tpu_custom_call.1} parent=27 // pred_check
        %p964 = pneg %p212
      $region34: #{tpu_custom_call.1} parent=27 // pred_check_branch
        %966 = sbr.rel (%p964) target = $region36
      $region35: #{tpu_custom_call.1} parent=27 // pred_region
        %vm967 = vcmask 7168
        %968 = vst.msk [vmem:[#allocation3] sm:$0xff] %vm967, %v808
        %969 = vst.msk [vmem:[#allocation3 + $0x8] sm:$0xff] %vm967, %v813
        %970 = vst.msk [vmem:[#allocation3 + $0x10] sm:$0xff] %vm967, %v818
        %971 = vst.msk [vmem:[#allocation3 + $0x18] sm:$0xff] %vm967, %v823
        %972 = vst.msk [vmem:[#allocation3 + $0x20] sm:$0xff] %vm967, %v828
        %973 = vst.msk [vmem:[#allocation3 + $0x28] sm:$0xff] %vm967, %v833
        %974 = vst.msk [vmem:[#allocation3 + $0x30] sm:$0xff] %vm967, %v838
        %975 = vst.msk [vmem:[#allocation3 + $0x38] sm:$0xff] %vm967, %v843
        %976 = vst.msk [vmem:[#allocation3 + $0x40] sm:$0xff] %vm967, %v848
        %977 = vst.msk [vmem:[#allocation3 + $0x48] sm:$0xff] %vm967, %v853
        %978 = vst.msk [vmem:[#allocation3 + $0x50] sm:$0xff] %vm967, %v858
        %979 = vst.msk [vmem:[#allocation3 + $0x58] sm:$0xff] %vm967, %v863
        %980 = vst.msk [vmem:[#allocation3 + $0x60] sm:$0xff] %vm967, %v868
        %981 = vst.msk [vmem:[#allocation3 + $0x68] sm:$0xff] %vm967, %v873
        %982 = vst.msk [vmem:[#allocation3 + $0x70] sm:$0xff] %vm967, %v878
        %983 = vst.msk [vmem:[#allocation3 + $0x78] sm:$0xff] %vm967, %v883
        %984 = vst.msk [vmem:[#allocation3 + $0x80] sm:$0xff] %vm967, %v888
        %985 = vst.msk [vmem:[#allocation3 + $0x88] sm:$0xff] %vm967, %v893
        %986 = vst.msk [vmem:[#allocation3 + $0x90] sm:$0xff] %vm967, %v898
        %987 = vst.msk [vmem:[#allocation3 + $0x98] sm:$0xff] %vm967, %v903
        %988 = vst.msk [vmem:[#allocation3 + $0xa0] sm:$0xff] %vm967, %v908
        %989 = vst.msk [vmem:[#allocation3 + $0xa8] sm:$0xff] %vm967, %v913
        %990 = vst.msk [vmem:[#allocation3 + $0xb0] sm:$0xff] %vm967, %v918
        %991 = vst.msk [vmem:[#allocation3 + $0xb8] sm:$0xff] %vm967, %v923
        %992 = vst.msk [vmem:[#allocation3 + $0xc0] sm:$0xff] %vm967, %v928
        %993 = vst.msk [vmem:[#allocation3 + $0xc8] sm:$0xff] %vm967, %v933
        %994 = vst.msk [vmem:[#allocation3 + $0xd0] sm:$0xff] %vm967, %v938
        %995 = vst.msk [vmem:[#allocation3 + $0xd8] sm:$0xff] %vm967, %v943
        %996 = vst.msk [vmem:[#allocation3 + $0xe0] sm:$0xff] %vm967, %v948
        %997 = vst.msk [vmem:[#allocation3 + $0xe8] sm:$0xff] %vm967, %v953
        %998 = vst.msk [vmem:[#allocation3 + $0xf0] sm:$0xff] %vm967, %v958
        %999 = vst.msk [vmem:[#allocation3 + $0xf8] sm:$0xff] %vm967, %v963
      $region36: #{tpu_custom_call.1} parent=27 // pred_fallthru
        _
      %p1000 = scmp.gt.s32.totalorder %s20, 0
      // Predicated region
      $region37: #{tpu_custom_call.1} parent=27 // pred_check
        %p1001 = pneg %p1000
      $region38: #{tpu_custom_call.1} parent=27 // pred_check_branch
        %1003 = sbr.rel (%p1001) target = $region40
      $region39: #{tpu_custom_call.1} parent=27 // pred_region
        %v1004 = vld [vmem:[#allocation3] sm:$0xff]
        %v1005 = vld [vmem:[#allocation3 + $0x8] sm:$0xff]
        %v1006 = vld [vmem:[#allocation3 + $0x10] sm:$0xff]
        %v1007 = vld [vmem:[#allocation3 + $0x18] sm:$0xff]
        %v1008 = vld [vmem:[#allocation3 + $0x20] sm:$0xff]
        %v1009 = vld [vmem:[#allocation3 + $0x28] sm:$0xff]
        %v1010 = vld [vmem:[#allocation3 + $0x30] sm:$0xff]
        %v1011 = vld [vmem:[#allocation3 + $0x38] sm:$0xff]
        %v1012 = vld [vmem:[#allocation3 + $0x40] sm:$0xff]
        %v1013 = vld [vmem:[#allocation3 + $0x48] sm:$0xff]
        %v1014 = vld [vmem:[#allocation3 + $0x50] sm:$0xff]
        %v1015 = vld [vmem:[#allocation3 + $0x58] sm:$0xff]
        %v1016 = vld [vmem:[#allocation3 + $0x60] sm:$0xff]
        %v1017 = vld [vmem:[#allocation3 + $0x68] sm:$0xff]
        %v1018 = vld [vmem:[#allocation3 + $0x70] sm:$0xff]
        %v1019 = vld [vmem:[#allocation3 + $0x78] sm:$0xff]
        %v1020 = vld [vmem:[#allocation3 + $0x80] sm:$0xff]
        %v1021 = vld [vmem:[#allocation3 + $0x88] sm:$0xff]
        %v1022 = vld [vmem:[#allocation3 + $0x90] sm:$0xff]
        %v1023 = vld [vmem:[#allocation3 + $0x98] sm:$0xff]
        %v1024 = vld [vmem:[#allocation3 + $0xa0] sm:$0xff]
        %v1025 = vld [vmem:[#allocation3 + $0xa8] sm:$0xff]
        %v1026 = vld [vmem:[#allocation3 + $0xb0] sm:$0xff]
        %v1027 = vld [vmem:[#allocation3 + $0xb8] sm:$0xff]
        %v1028 = vld [vmem:[#allocation3 + $0xc0] sm:$0xff]
        %v1029 = vld [vmem:[#allocation3 + $0xc8] sm:$0xff]
        %v1030 = vld [vmem:[#allocation3 + $0xd0] sm:$0xff]
        %v1031 = vld [vmem:[#allocation3 + $0xd8] sm:$0xff]
        %v1032 = vld [vmem:[#allocation3 + $0xe0] sm:$0xff]
        %v1033 = vld [vmem:[#allocation3 + $0xe8] sm:$0xff]
        %v1034 = vld [vmem:[#allocation3 + $0xf0] sm:$0xff]
        %v1035 = vld [vmem:[#allocation3 + $0xf8] sm:$0xff]
        %v1036 = vmin.f32 %v1004, %v808
        %v1037 = vmin.f32 %v1005, %v813
        %v1038 = vmin.f32 %v1006, %v818
        %v1039 = vmin.f32 %v1007, %v823
        %v1040 = vmin.f32 %v1008, %v828
        %v1041 = vmin.f32 %v1009, %v833
        %v1042 = vmin.f32 %v1010, %v838
        %v1043 = vmin.f32 %v1011, %v843
        %v1044 = vmin.f32 %v1012, %v848
        %v1045 = vmin.f32 %v1013, %v853
        %v1046 = vmin.f32 %v1014, %v858
        %v1047 = vmin.f32 %v1015, %v863
        %v1048 = vmin.f32 %v1016, %v868
        %v1049 = vmin.f32 %v1017, %v873
        %v1050 = vmin.f32 %v1018, %v878
        %v1051 = vmin.f32 %v1019, %v883
        %v1052 = vmin.f32 %v1020, %v888
        %v1053 = vmin.f32 %v1021, %v893
        %v1054 = vmin.f32 %v1022, %v898
        %v1055 = vmin.f32 %v1023, %v903
        %v1056 = vmin.f32 %v1024, %v908
        %v1057 = vmin.f32 %v1025, %v913
        %v1058 = vmin.f32 %v1026, %v918
        %v1059 = vmin.f32 %v1027, %v923
        %v1060 = vmin.f32 %v1028, %v928
        %v1061 = vmin.f32 %v1029, %v933
        %v1062 = vmin.f32 %v1030, %v938
        %v1063 = vmin.f32 %v1031, %v943
        %v1064 = vmin.f32 %v1032, %v948
        %v1065 = vmin.f32 %v1033, %v953
        %v1066 = vmin.f32 %v1034, %v958
        %v1067 = vmin.f32 %v1035, %v963
        %vm1068 = vcmask 7168
        %1069 = vst.msk [vmem:[#allocation3] sm:$0xff] %vm1068, %v1036
        %1070 = vst.msk [vmem:[#allocation3 + $0x8] sm:$0xff] %vm1068, %v1037
        %1071 = vst.msk [vmem:[#allocation3 + $0x10] sm:$0xff] %vm1068, %v1038
        %1072 = vst.msk [vmem:[#allocation3 + $0x18] sm:$0xff] %vm1068, %v1039
        %1073 = vst.msk [vmem:[#allocation3 + $0x20] sm:$0xff] %vm1068, %v1040
        %1074 = vst.msk [vmem:[#allocation3 + $0x28] sm:$0xff] %vm1068, %v1041
        %1075 = vst.msk [vmem:[#allocation3 + $0x30] sm:$0xff] %vm1068, %v1042
        %1076 = vst.msk [vmem:[#allocation3 + $0x38] sm:$0xff] %vm1068, %v1043
        %1077 = vst.msk [vmem:[#allocation3 + $0x40] sm:$0xff] %vm1068, %v1044
        %1078 = vst.msk [vmem:[#allocation3 + $0x48] sm:$0xff] %vm1068, %v1045
        %1079 = vst.msk [vmem:[#allocation3 + $0x50] sm:$0xff] %vm1068, %v1046
        %1080 = vst.msk [vmem:[#allocation3 + $0x58] sm:$0xff] %vm1068, %v1047
        %1081 = vst.msk [vmem:[#allocation3 + $0x60] sm:$0xff] %vm1068, %v1048
        %1082 = vst.msk [vmem:[#allocation3 + $0x68] sm:$0xff] %vm1068, %v1049
        %1083 = vst.msk [vmem:[#allocation3 + $0x70] sm:$0xff] %vm1068, %v1050
        %1084 = vst.msk [vmem:[#allocation3 + $0x78] sm:$0xff] %vm1068, %v1051
        %1085 = vst.msk [vmem:[#allocation3 + $0x80] sm:$0xff] %vm1068, %v1052
        %1086 = vst.msk [vmem:[#allocation3 + $0x88] sm:$0xff] %vm1068, %v1053
        %1087 = vst.msk [vmem:[#allocation3 + $0x90] sm:$0xff] %vm1068, %v1054
        %1088 = vst.msk [vmem:[#allocation3 + $0x98] sm:$0xff] %vm1068, %v1055
        %1089 = vst.msk [vmem:[#allocation3 + $0xa0] sm:$0xff] %vm1068, %v1056
        %1090 = vst.msk [vmem:[#allocation3 + $0xa8] sm:$0xff] %vm1068, %v1057
        %1091 = vst.msk [vmem:[#allocation3 + $0xb0] sm:$0xff] %vm1068, %v1058
        %1092 = vst.msk [vmem:[#allocation3 + $0xb8] sm:$0xff] %vm1068, %v1059
        %1093 = vst.msk [vmem:[#allocation3 + $0xc0] sm:$0xff] %vm1068, %v1060
        %1094 = vst.msk [vmem:[#allocation3 + $0xc8] sm:$0xff] %vm1068, %v1061
        %1095 = vst.msk [vmem:[#allocation3 + $0xd0] sm:$0xff] %vm1068, %v1062
        %1096 = vst.msk [vmem:[#allocation3 + $0xd8] sm:$0xff] %vm1068, %v1063
        %1097 = vst.msk [vmem:[#allocation3 + $0xe0] sm:$0xff] %vm1068, %v1064
        %1098 = vst.msk [vmem:[#allocation3 + $0xe8] sm:$0xff] %vm1068, %v1065
        %1099 = vst.msk [vmem:[#allocation3 + $0xf0] sm:$0xff] %vm1068, %v1066
        %1100 = vst.msk [vmem:[#allocation3 + $0xf8] sm:$0xff] %vm1068, %v1067
      $region40: #{tpu_custom_call.1} parent=27 // pred_fallthru
        _
      %v1101 = vmin.f32 %v370, %v373
      %v1102 = vmin.f32 %v1101, %v376
      %v1103 = vmin.f32 %v1102, %v379
      %v1104 = vmin.f32 %v1103, %v382
      %v1105 = vmin.f32 %v1104, %v385
      %v1106 = vmin.f32 %v1105, %v388
      %v1107 = vmin.f32 %v1106, %v391
      %v1108 = vmin.f32 %v1107, %v394
      %v1109 = vmin.f32 %v1108, %v397
      %v1110 = vmin.f32 %v1109, %v400
      %v1111 = vmin.f32 %v1110, %v403
      %v1112 = vmin.f32 %v1111, %v406
      %v1113 = vmin.f32 %v1112, %v409
      %v1114 = vmin.f32 %v1113, %v412
      %v1115 = vmin.f32 %v1114, %v415
      %v1116 = vmin.f32 %v1115, %v418
      %v1117 = vmin.f32 %v1116, %v421
      %v1118 = vmin.f32 %v1117, %v424
      %v1119 = vmin.f32 %v1118, %v427
      %v1120 = vmin.f32 %v1119, %v430
      %v1121 = vmin.f32 %v1120, %v433
      %v1122 = vmin.f32 %v1121, %v436
      %v1123 = vmin.f32 %v1122, %v439
      %v1124 = vmin.f32 %v1123, %v442
      %v1125 = vmin.f32 %v1124, %v445
      %v1126 = vmin.f32 %v1125, %v448
      %v1127 = vmin.f32 %v1126, %v451
      %v1128 = vmin.f32 %v1127, %v454
      %v1129 = vmin.f32 %v1128, %v457
      %v1130 = vmin.f32 %v1129, %v460
      %v1131 = vmin.f32 %v1130, %v463
      %v1132 = vrot.slane %v1131, 4
      %v1133 = vmin.f32 %v1131, %v1132
      %v1134 = vrot.slane %v1133, 2
      %v1135 = vmin.f32 %v1133, %v1134
      %v1136 = vrot.slane %v1135, 1
      %v1137 = vmin.f32 %v1135, %v1136
      %v1138 = vmin.f32 %v483, %v486
      %v1139 = vmin.f32 %v1138, %v489
      %v1140 = vmin.f32 %v1139, %v492
      %v1141 = vmin.f32 %v1140, %v495
      %v1142 = vmin.f32 %v1141, %v498
      %v1143 = vmin.f32 %v1142, %v501
      %v1144 = vmin.f32 %v1143, %v504
      %v1145 = vmin.f32 %v1144, %v507
      %v1146 = vmin.f32 %v1145, %v510
      %v1147 = vmin.f32 %v1146, %v513
      %v1148 = vmin.f32 %v1147, %v516
      %v1149 = vmin.f32 %v1148, %v519
      %v1150 = vmin.f32 %v1149, %v522
      %v1151 = vmin.f32 %v1150, %v525
      %v1152 = vmin.f32 %v1151, %v528
      %v1153 = vmin.f32 %v1152, %v531
      %v1154 = vmin.f32 %v1153, %v534
      %v1155 = vmin.f32 %v1154, %v537
      %v1156 = vmin.f32 %v1155, %v540
      %v1157 = vmin.f32 %v1156, %v543
      %v1158 = vmin.f32 %v1157, %v546
      %v1159 = vmin.f32 %v1158, %v549
      %v1160 = vmin.f32 %v1159, %v552
      %v1161 = vmin.f32 %v1160, %v555
      %v1162 = vmin.f32 %v1161, %v558
      %v1163 = vmin.f32 %v1162, %v561
      %v1164 = vmin.f32 %v1163, %v564
      %v1165 = vmin.f32 %v1164, %v567
      %v1166 = vmin.f32 %v1165, %v570
      %v1167 = vmin.f32 %v1166, %v573
      %v1168 = vmin.f32 %v1167, %v576
      %v1169 = vrot.slane %v1168, 4
      %v1170 = vmin.f32 %v1168, %v1169
      %v1171 = vrot.slane %v1170, 2
      %v1172 = vmin.f32 %v1170, %v1171
      %v1173 = vrot.slane %v1172, 1
      %v1174 = vmin.f32 %v1172, %v1173
      %v1175 = vmin.f32 %v596, %v599
      %v1176 = vmin.f32 %v1175, %v602
      %v1177 = vmin.f32 %v1176, %v605
      %v1178 = vmin.f32 %v1177, %v608
      %v1179 = vmin.f32 %v1178, %v611
      %v1180 = vmin.f32 %v1179, %v614
      %v1181 = vmin.f32 %v1180, %v617
      %v1182 = vmin.f32 %v1181, %v620
      %v1183 = vmin.f32 %v1182, %v623
      %v1184 = vmin.f32 %v1183, %v626
      %v1185 = vmin.f32 %v1184, %v629
      %v1186 = vmin.f32 %v1185, %v632
      %v1187 = vmin.f32 %v1186, %v635
      %v1188 = vmin.f32 %v1187, %v638
      %v1189 = vmin.f32 %v1188, %v641
      %v1190 = vmin.f32 %v1189, %v644
      %v1191 = vmin.f32 %v1190, %v647
      %v1192 = vmin.f32 %v1191, %v650
      %v1193 = vmin.f32 %v1192, %v653
      %v1194 = vmin.f32 %v1193, %v656
      %v1195 = vmin.f32 %v1194, %v659
      %v1196 = vmin.f32 %v1195, %v662
      %v1197 = vmin.f32 %v1196, %v665
      %v1198 = vmin.f32 %v1197, %v668
      %v1199 = vmin.f32 %v1198, %v671
      %v1200 = vmin.f32 %v1199, %v674
      %v1201 = vmin.f32 %v1200, %v677
      %v1202 = vmin.f32 %v1201, %v680
      %v1203 = vmin.f32 %v1202, %v683
      %v1204 = vmin.f32 %v1203, %v686
      %v1205 = vmin.f32 %v1204, %v689
      %v1206 = vrot.slane %v1205, 4
      %v1207 = vmin.f32 %v1205, %v1206
      %v1208 = vrot.slane %v1207, 2
      %v1209 = vmin.f32 %v1207, %v1208
      %v1210 = vrot.slane %v1209, 1
      %v1211 = vmin.f32 %v1209, %v1210
      %v1212 = vmin.f32 %v709, %v712
      %v1213 = vmin.f32 %v1212, %v715
      %v1214 = vmin.f32 %v1213, %v718
      %v1215 = vmin.f32 %v1214, %v721
      %v1216 = vmin.f32 %v1215, %v724
      %v1217 = vmin.f32 %v1216, %v727
      %v1218 = vmin.f32 %v1217, %v730
      %v1219 = vmin.f32 %v1218, %v733
      %v1220 = vmin.f32 %v1219, %v736
      %v1221 = vmin.f32 %v1220, %v739
      %v1222 = vmin.f32 %v1221, %v742
      %v1223 = vmin.f32 %v1222, %v745
      %v1224 = vmin.f32 %v1223, %v748
      %v1225 = vmin.f32 %v1224, %v751
      %v1226 = vmin.f32 %v1225, %v754
      %v1227 = vmin.f32 %v1226, %v757
      %v1228 = vmin.f32 %v1227, %v760
      %v1229 = vmin.f32 %v1228, %v763
      %v1230 = vmin.f32 %v1229, %v766
      %v1231 = vmin.f32 %v1230, %v769
      %v1232 = vmin.f32 %v1231, %v772
      %v1233 = vmin.f32 %v1232, %v775
      %v1234 = vmin.f32 %v1233, %v778
      %v1235 = vmin.f32 %v1234, %v781
      %v1236 = vmin.f32 %v1235, %v784
      %v1237 = vmin.f32 %v1236, %v787
      %v1238 = vmin.f32 %v1237, %v790
      %v1239 = vmin.f32 %v1238, %v793
      %v1240 = vmin.f32 %v1239, %v796
      %v1241 = vmin.f32 %v1240, %v799
      %v1242 = vmin.f32 %v1241, %v802
      %v1243 = vrot.slane %v1242, 4
      %v1244 = vmin.f32 %v1242, %v1243
      %v1245 = vrot.slane %v1244, 2
      %v1246 = vmin.f32 %v1244, %v1245
      %v1247 = vrot.slane %v1246, 1
      %v1248 = vmin.f32 %v1246, %v1247
      // Predicated region
      $region41: #{tpu_custom_call.1} parent=27 // pred_check
        %p1249 = pneg %p211
      $region42: #{tpu_custom_call.1} parent=27 // pred_check_branch
        %1251 = sbr.rel (%p1249) target = $region44
      $region43: #{tpu_custom_call.1} parent=27 // pred_region
        %v1256 = vrot.slane %v1174, 7
        %v1257 = vrot.slane %v1211, 6
        %v1258 = vrot.slane %v1248, 5
        %vm1259 = vcmask 1040384
        %v1260 = vsel %vm1259, %v1137, %v1256
        %vm1261 = vcmask 1042434
        %v1262 = vsel %vm1261, %v1257, %v1258
        %vm1263 = vcmask 1041408
        %v1264 = vsel %vm1263, %v1260, %v1262
        %v1266 = vlaneseq
        %vm1267 = vcmp.ge.s32.totalorder %v1266, 0
        %vm1268 = vcmp.lt.s32.totalorder %v1266, 512
        %vm1269 = vmand %vm1267, %vm1268
        %s1270 = sshra.s32 %s20, 1
        %s1271 = sand.u32 %s20, 1
        %s1272 = sshra.s32 %s20, 1
        %s1273 = sand.u32 %s20, 1
        %s1274 = smul.u32 %s1270, 4
        %s1275 = smul.u32 %s1274, 2
        %s1276 = sadd.s32 %s1275, %s1273
        %s1277 = scalar_lea.vmem [#allocation4], %s1276
        %1278 = vst.msk [vmem:[%s1277] ss:$2 sm:$0xf] %vm1269, %v1264
      $region44: #{tpu_custom_call.1} parent=27 // pred_fallthru
        _
      %p1279 = scmp.gt.s32.totalorder %s19, 0
      // Predicated region
      $region45: #{tpu_custom_call.1} parent=27 // pred_check
        %p1280 = pneg %p1279
      $region46: #{tpu_custom_call.1} parent=27 // pred_check_branch
        %1282 = sbr.rel (%p1280) target = $region48
      $region47: #{tpu_custom_call.1} parent=27 // pred_region
        %s1283 = sshra.s32 %s20, 1
        %s1284 = sand.u32 %s20, 1
        %s1285 = sshra.s32 %s20, 1
        %s1286 = sand.u32 %s20, 1
        %s1287 = smul.u32 %s1283, 4
        %s1288 = smul.u32 %s1287, 2
        %s1289 = sadd.s32 %s1288, %s1286
        %s1290 = scalar_lea.vmem [#allocation4], %s1289
        %v1291 = vld [vmem:[%s1290] ss:$2 sm:$0xf]
        %v1296 = vrot.slane %v1174, 7
        %v1297 = vrot.slane %v1211, 6
        %v1298 = vrot.slane %v1248, 5
        %vm1299 = vcmask 1040384
        %v1300 = vsel %vm1299, %v1137, %v1296
        %vm1301 = vcmask 1042434
        %v1302 = vsel %vm1301, %v1297, %v1298
        %vm1303 = vcmask 1041408
        %v1304 = vsel %vm1303, %v1300, %v1302
        %v1306 = vmin.f32 %v1291, %v1304
        %v1307 = vlaneseq
        %vm1308 = vcmp.ge.s32.totalorder %v1307, 0
        %vm1309 = vcmp.lt.s32.totalorder %v1307, 512
        %vm1310 = vmand %vm1308, %vm1309
        %1311 = vst.msk [vmem:[%s1290] ss:$2 sm:$0xf] %vm1310, %v1306
      $region48: #{tpu_custom_call.1} parent=27 // pred_fallthru
        _
      %p1312 = scmp.eq.s32.totalorder %s20, 1
      // Predicated region
      $region49: #{tpu_custom_call.1} parent=27 // pred_check
        %p1313 = pneg %p1312
      $region50: #{tpu_custom_call.1} parent=27 // pred_check_branch
        %1315 = sbr.rel (%p1313) target = $region52
      $region51: #{tpu_custom_call.1} parent=27 // pred_region
        %v1316 = vld [vmem:[#allocation3] sm:$0xff]
        %v1317 = vld [vmem:[#allocation3 + $0x8] sm:$0xff]
        %v1318 = vld [vmem:[#allocation3 + $0x10] sm:$0xff]
        %v1319 = vld [vmem:[#allocation3 + $0x18] sm:$0xff]
        %v1320 = vld [vmem:[#allocation3 + $0x20] sm:$0xff]
        %v1321 = vld [vmem:[#allocation3 + $0x28] sm:$0xff]
        %v1322 = vld [vmem:[#allocation3 + $0x30] sm:$0xff]
        %v1323 = vld [vmem:[#allocation3 + $0x38] sm:$0xff]
        %v1324 = vld [vmem:[#allocation3 + $0x40] sm:$0xff]
        %v1325 = vld [vmem:[#allocation3 + $0x48] sm:$0xff]
        %v1326 = vld [vmem:[#allocation3 + $0x50] sm:$0xff]
        %v1327 = vld [vmem:[#allocation3 + $0x58] sm:$0xff]
        %v1328 = vld [vmem:[#allocation3 + $0x60] sm:$0xff]
        %v1329 = vld [vmem:[#allocation3 + $0x68] sm:$0xff]
        %v1330 = vld [vmem:[#allocation3 + $0x70] sm:$0xff]
        %v1331 = vld [vmem:[#allocation3 + $0x78] sm:$0xff]
        %v1332 = vld [vmem:[#allocation3 + $0x80] sm:$0xff]
        %v1333 = vld [vmem:[#allocation3 + $0x88] sm:$0xff]
        %v1334 = vld [vmem:[#allocation3 + $0x90] sm:$0xff]
        %v1335 = vld [vmem:[#allocation3 + $0x98] sm:$0xff]
        %v1336 = vld [vmem:[#allocation3 + $0xa0] sm:$0xff]
        %v1337 = vld [vmem:[#allocation3 + $0xa8] sm:$0xff]
        %v1338 = vld [vmem:[#allocation3 + $0xb0] sm:$0xff]
        %v1339 = vld [vmem:[#allocation3 + $0xb8] sm:$0xff]
        %v1340 = vld [vmem:[#allocation3 + $0xc0] sm:$0xff]
        %v1341 = vld [vmem:[#allocation3 + $0xc8] sm:$0xff]
        %v1342 = vld [vmem:[#allocation3 + $0xd0] sm:$0xff]
        %v1343 = vld [vmem:[#allocation3 + $0xd8] sm:$0xff]
        %v1344 = vld [vmem:[#allocation3 + $0xe0] sm:$0xff]
        %v1345 = vld [vmem:[#allocation3 + $0xe8] sm:$0xff]
        %v1346 = vld [vmem:[#allocation3 + $0xf0] sm:$0xff]
        %v1347 = vld [vmem:[#allocation3 + $0xf8] sm:$0xff]
        %vm1348 = vcmp.lt.f32.partialorder %v1316, 1e+10
        %vm1349 = vcmp.lt.f32.partialorder %v1317, 1e+10
        %vm1350 = vcmp.lt.f32.partialorder %v1318, 1e+10
        %vm1351 = vcmp.lt.f32.partialorder %v1319, 1e+10
        %vm1352 = vcmp.lt.f32.partialorder %v1320, 1e+10
        %vm1353 = vcmp.lt.f32.partialorder %v1321, 1e+10
        %vm1354 = vcmp.lt.f32.partialorder %v1322, 1e+10
        %vm1355 = vcmp.lt.f32.partialorder %v1323, 1e+10
        %vm1356 = vcmp.lt.f32.partialorder %v1324, 1e+10
        %vm1357 = vcmp.lt.f32.partialorder %v1325, 1e+10
        %vm1358 = vcmp.lt.f32.partialorder %v1326, 1e+10
        %vm1359 = vcmp.lt.f32.partialorder %v1327, 1e+10
        %vm1360 = vcmp.lt.f32.partialorder %v1328, 1e+10
        %vm1361 = vcmp.lt.f32.partialorder %v1329, 1e+10
        %vm1362 = vcmp.lt.f32.partialorder %v1330, 1e+10
        %vm1363 = vcmp.lt.f32.partialorder %v1331, 1e+10
        %vm1364 = vcmp.lt.f32.partialorder %v1332, 1e+10
        %vm1365 = vcmp.lt.f32.partialorder %v1333, 1e+10
        %vm1366 = vcmp.lt.f32.partialorder %v1334, 1e+10
        %vm1367 = vcmp.lt.f32.partialorder %v1335, 1e+10
        %vm1368 = vcmp.lt.f32.partialorder %v1336, 1e+10
        %vm1369 = vcmp.lt.f32.partialorder %v1337, 1e+10
        %vm1370 = vcmp.lt.f32.partialorder %v1338, 1e+10
        %vm1371 = vcmp.lt.f32.partialorder %v1339, 1e+10
        %vm1372 = vcmp.lt.f32.partialorder %v1340, 1e+10
        %vm1373 = vcmp.lt.f32.partialorder %v1341, 1e+10
        %vm1374 = vcmp.lt.f32.partialorder %v1342, 1e+10
        %vm1375 = vcmp.lt.f32.partialorder %v1343, 1e+10
        %vm1376 = vcmp.lt.f32.partialorder %v1344, 1e+10
        %vm1377 = vcmp.lt.f32.partialorder %v1345, 1e+10
        %vm1378 = vcmp.lt.f32.partialorder %v1346, 1e+10
        %vm1379 = vcmp.lt.f32.partialorder %v1347, 1e+10
        %v1380 = vsel %vm1348, %v1316, -1.0
        %v1381 = vsel %vm1349, %v1317, -1.0
        %v1382 = vsel %vm1350, %v1318, -1.0
        %v1383 = vsel %vm1351, %v1319, -1.0
        %v1384 = vsel %vm1352, %v1320, -1.0
        %v1385 = vsel %vm1353, %v1321, -1.0
        %v1386 = vsel %vm1354, %v1322, -1.0
        %v1387 = vsel %vm1355, %v1323, -1.0
        %v1388 = vsel %vm1356, %v1324, -1.0
        %v1389 = vsel %vm1357, %v1325, -1.0
        %v1390 = vsel %vm1358, %v1326, -1.0
        %v1391 = vsel %vm1359, %v1327, -1.0
        %v1392 = vsel %vm1360, %v1328, -1.0
        %v1393 = vsel %vm1361, %v1329, -1.0
        %v1394 = vsel %vm1362, %v1330, -1.0
        %v1395 = vsel %vm1363, %v1331, -1.0
        %v1396 = vsel %vm1364, %v1332, -1.0
        %v1397 = vsel %vm1365, %v1333, -1.0
        %v1398 = vsel %vm1366, %v1334, -1.0
        %v1399 = vsel %vm1367, %v1335, -1.0
        %v1400 = vsel %vm1368, %v1336, -1.0
        %v1401 = vsel %vm1369, %v1337, -1.0
        %v1402 = vsel %vm1370, %v1338, -1.0
        %v1403 = vsel %vm1371, %v1339, -1.0
        %v1404 = vsel %vm1372, %v1340, -1.0
        %v1405 = vsel %vm1373, %v1341, -1.0
        %v1406 = vsel %vm1374, %v1342, -1.0
        %v1407 = vsel %vm1375, %v1343, -1.0
        %v1408 = vsel %vm1376, %v1344, -1.0
        %v1409 = vsel %vm1377, %v1345, -1.0
        %v1410 = vsel %vm1378, %v1346, -1.0
        %v1411 = vsel %vm1379, %v1347, -1.0
        %v1412 = vld [vmem:[#allocation2] sm:$0x1]
        %vm1413 = vcmask 7168
        %v1414 = vsel %vm1413, %v1380, -inf
        %v1415 = vsel %vm1413, %v1381, -inf
        %v1416 = vsel %vm1413, %v1382, -inf
        %v1417 = vsel %vm1413, %v1383, -inf
        %v1418 = vsel %vm1413, %v1384, -inf
        %v1419 = vmax.f32 %v1414, %v1418
        %v1420 = vsel %vm1413, %v1385, -inf
        %v1421 = vmax.f32 %v1415, %v1420
        %v1422 = vsel %vm1413, %v1386, -inf
        %v1423 = vmax.f32 %v1416, %v1422
        %v1424 = vsel %vm1413, %v1387, -inf
        %v1425 = vmax.f32 %v1417, %v1424
        %v1426 = vsel %vm1413, %v1388, -inf
        %v1427 = vmax.f32 %v1419, %v1426
        %v1428 = vsel %vm1413, %v1389, -inf
        %v1429 = vmax.f32 %v1421, %v1428
        %v1430 = vsel %vm1413, %v1390, -inf
        %v1431 = vmax.f32 %v1423, %v1430
        %v1432 = vsel %vm1413, %v1391, -inf
        %v1433 = vmax.f32 %v1425, %v1432
        %v1434 = vsel %vm1413, %v1392, -inf
        %v1435 = vmax.f32 %v1427, %v1434
        %v1436 = vsel %vm1413, %v1393, -inf
        %v1437 = vmax.f32 %v1429, %v1436
        %v1438 = vsel %vm1413, %v1394, -inf
        %v1439 = vmax.f32 %v1431, %v1438
        %v1440 = vsel %vm1413, %v1395, -inf
        %v1441 = vmax.f32 %v1433, %v1440
        %v1442 = vsel %vm1413, %v1396, -inf
        %v1443 = vmax.f32 %v1435, %v1442
        %v1444 = vsel %vm1413, %v1397, -inf
        %v1445 = vmax.f32 %v1437, %v1444
        %v1446 = vsel %vm1413, %v1398, -inf
        %v1447 = vmax.f32 %v1439, %v1446
        %v1448 = vsel %vm1413, %v1399, -inf
        %v1449 = vmax.f32 %v1441, %v1448
        %v1450 = vsel %vm1413, %v1400, -inf
        %v1451 = vmax.f32 %v1443, %v1450
        %v1452 = vsel %vm1413, %v1401, -inf
        %v1453 = vmax.f32 %v1445, %v1452
        %v1454 = vsel %vm1413, %v1402, -inf
        %v1455 = vmax.f32 %v1447, %v1454
        %v1456 = vsel %vm1413, %v1403, -inf
        %v1457 = vmax.f32 %v1449, %v1456
        %v1458 = vsel %vm1413, %v1404, -inf
        %v1459 = vmax.f32 %v1451, %v1458
        %v1460 = vsel %vm1413, %v1405, -inf
        %v1461 = vmax.f32 %v1453, %v1460
        %v1462 = vsel %vm1413, %v1406, -inf
        %v1463 = vmax.f32 %v1455, %v1462
        %v1464 = vsel %vm1413, %v1407, -inf
        %v1465 = vmax.f32 %v1457, %v1464
        %v1466 = vsel %vm1413, %v1408, -inf
        %v1467 = vmax.f32 %v1459, %v1466
        %v1468 = vsel %vm1413, %v1409, -inf
        %v1469 = vmax.f32 %v1461, %v1468
        %v1470 = vsel %vm1413, %v1410, -inf
        %v1471 = vmax.f32 %v1463, %v1470
        %v1472 = vsel %vm1413, %v1411, -inf
        %v1473 = vmax.f32 %v1465, %v1472
        %v1474 = vmax.f32 %v1467, %v1469
        %v1475 = vmax.f32 %v1471, %v1473
        %v1476 = vmax.f32 %v1474, %v1475
        %1477 = vmax.xlane.f32.xlu0 %v1476
        %v1478 = vpop.xlane.xlu0 %1477
        %v1479 = vrot.slane %v1478, 4
        %v1480 = vmax.f32 %v1478, %v1479
        %v1481 = vrot.slane %v1480, 2
        %v1482 = vmax.f32 %v1480, %v1481
        %v1483 = vrot.slane %v1482, 1
        %v1484 = vmax.f32 %v1482, %v1483
        %s1485 = vtos %v1484
        %v1486 = vstv %s1485
        %v1487 = vmax.f32 %v1412, %v1486
        %vm1488 = vcmask 0
        %1489 = vst.msk [vmem:[#allocation2] sm:$0x1] %vm1488, %v1487
      $region52: #{tpu_custom_call.1} parent=27 // pred_fallthru
        _
      %p1490 = scmp.eq.s32.totalorder %s19, 3
      // Predicated region
      $region53: #{tpu_custom_call.1} parent=27 // pred_check
        %p1491 = pneg %p1490
      $region54: #{tpu_custom_call.1} parent=27 // pred_check_branch
        %1493 = sbr.rel (%p1491) target = $region56
      $region55: #{tpu_custom_call.1} parent=27 // pred_region
        %s1494 = sshra.s32 %s20, 1
        %s1495 = sand.u32 %s20, 1
        %s1496 = sshra.s32 %s20, 1
        %s1497 = sand.u32 %s20, 1
        %s1498 = smul.u32 %s1494, 4
        %s1499 = smul.u32 %s1498, 2
        %s1500 = sadd.s32 %s1499, %s1497
        %s1501 = scalar_lea.vmem [#allocation4], %s1500
        %v1502 = vld [vmem:[%s1501] ss:$2 sm:$0xf]
        %vm1503 = vcmp.lt.f32.partialorder %v1502, 1e+10
        %v1504 = vsel %vm1503, %v1502, -1.0
        %v1505 = vld [vmem:[#allocation2] sm:$0x1]
        %v1507 = vperm.slane %v1504, 0
        %v1508 = vperm.slane %v1504, 1
        %v1509 = vperm.slane %v1504, 2
        %v1510 = vperm.slane %v1504, 3
        %vm1515 = vcmask 1040384
        %v1516 = vsel %vm1515, %v1507, -inf
        %v1517 = vsel %vm1515, %v1508, -inf
        %v1518 = vsel %vm1515, %v1509, -inf
        %v1519 = vsel %vm1515, %v1510, -inf
        %v1520 = vmax.f32 %v1516, %v1517
        %v1521 = vmax.f32 %v1518, %v1519
        %v1522 = vmax.f32 %v1520, %v1521
        %1523 = vmax.xlane.f32.xlu0 %v1522
        %v1524 = vpop.xlane.xlu0 %1523
        %v1525 = vrot.slane %v1524, 4
        %v1526 = vmax.f32 %v1524, %v1525
        %v1527 = vrot.slane %v1526, 2
        %v1528 = vmax.f32 %v1526, %v1527
        %v1529 = vrot.slane %v1528, 1
        %v1530 = vmax.f32 %v1528, %v1529
        %s1531 = vtos %v1530
        %v1532 = vstv %s1531
        %v1533 = vmax.f32 %v1505, %v1532
        %vm1534 = vcmask 0
        %1535 = vst.msk [vmem:[#allocation2] sm:$0x1] %vm1534, %v1533
      $region56: #{tpu_custom_call.1} parent=27 // pred_fallthru
        _
      %p1536 = pnand %p1490, %p1312
      %p1537 = pneg %p1536
      // Predicated region
      $region57: #{tpu_custom_call.1} parent=27 // pred_check
        _
      $region58: #{tpu_custom_call.1} parent=27 // pred_check_branch
        %1539 = sbr.rel (%p1536) target = $region60
      $region59: #{tpu_custom_call.1} parent=27 // pred_region
        %v1540 = vld [vmem:[#allocation2] sm:$0x1]
        %v1541 = vmax.f32 %v1540, 0.0
        %v1542 = vrsqrt.pop %v1541
        %v1543 = vmul.f32 %v1542, %v1541
        %v1544 = vmul.f32 %v1543, %v1542
        %v1545 = vmul.f32 0.5, %v1544
        %v1546 = vsub.f32 1.5, %v1545
        %v1547 = vmul.f32 %v1542, %v1546
        %v1548 = vmul.f32 %v1541, %v1547
        %vm1549 = vcmp.eq.f32.partialorder %v1541, inf
        %v1550 = vsel %vm1549, %v1541, %v1548
        %vm1551 = vcmp.eq.f32.partialorder %v1541, 0.0
        %v1552 = vand.u32 %v1541, 2147483648
        %v1553 = vsel %vm1551, %v1552, %v1550
        %vm1554 = vcmask 0
        %1555 = vst.msk [vmem:[%s210] sm:$0x1] %vm1554, %v1553
      $region60: #{tpu_custom_call.1} parent=27 // pred_fallthru
        _
      %p1556 = scmp.lt.s32.totalorder %s18, 3
      %s1557 = scalar_select %p1556, %s18, 3
      %s1558 = scalar_lea.vmem %s2, %s1557
      // Predicated region
      $region61: #{tpu_custom_call.1} parent=27 // pred_check
        %p1559 = pneg %p106
      $region62: #{tpu_custom_call.1} parent=27 // pred_check_branch
        %1561 = sbr.rel (%p1559) target = $region64
      $region63: #{tpu_custom_call.1} parent=27 // pred_region
        _
      $region64: #{tpu_custom_call.1} parent=27 // pred_fallthru
        _
    $region28: #{tpu_custom_call.1} parent=5 // pred_fallthru
      _
    %p1562 = scmp.le.s32.totalorder 2, %s8
    // Predicated region
    $region65: #{tpu_custom_call.1} parent=5 // pred_check
      %p1563 = pneg %p1562
    $region66: #{tpu_custom_call.1} parent=5 // pred_check_branch
      %1565 = sbr.rel (%p1563) target = $region68
    $region67: #{tpu_custom_call.1} parent=5 // pred_region
      %s1566 = ssub.s32 %s8, 2
      // Predicated region
      $region69: #{tpu_custom_call.1} parent=67 // pred_check
        %p1567 = pneg %p112
      $region70: #{tpu_custom_call.1} parent=67 // pred_check_branch
        %1569 = sbr.rel (%p1567) target = $region72
      $region71: #{tpu_custom_call.1} parent=67 // pred_region
        %p1570 = scmp.lt.s32.totalorder %s21, 3
        %s1571 = scalar_select %p1570, %s21, 3
        %s1572 = scalar_lea.vmem %s2, %s1571
      $region72: #{tpu_custom_call.1} parent=67 // pred_fallthru
        _
    $region68: #{tpu_custom_call.1} parent=5 // pred_fallthru
      _
  $region6: #{tpu_custom_call.1} parent=0 // loop_footer
    %s12 = sadd.s32 1, %s8
  $region7: #{tpu_custom_call.1} parent=0 // loop_footer_branch
    %7 = sbr.rel target = $region3
  $region8: #{tpu_custom_call.1} parent=0 // loop_exit
    _

</llo_original>
